<compile_context>
chip_gen: v5e
topology: v5e:2x2
jax: 0.10.0
libtpu: 0.0.40
codegen_flags: <defaults>
</compile_context>

<pallas_src>
import functools
import math

import jax
import jax.numpy as jnp
from jax import lax
from jax.experimental import pallas as pl
from jax.experimental.pallas import tpu as pltpu

_NEG = -1e9      # "log zero" for padded states / rows / frames (finite: no inf-inf NaNs)
_TINY = 1e-30


def _round_up(x, m):
    return ((x + m - 1) // m) * m


def _device_vmem_budget():
    """Physical VMEM of the local TPU minus headroom (v7x-safe fallback)."""
    cap = 64 * 1024 * 1024
    try:
        cap = int(pltpu.get_tpu_info().vmem_capacity_bytes)
    except Exception:
        pass
    return max(cap - 8 * 1024 * 1024, 16 * 1024 * 1024)


def _resident_spec(block_shape, index_map):
    """BlockSpec for inputs whose block never changes: single-buffered."""
    try:
        return pl.BlockSpec(block_shape, index_map, pipeline_mode=pl.Buffered(1))
    except TypeError:                      # older jax without pipeline_mode kwarg
        return pl.BlockSpec(block_shape, index_map)


def _pick_frames_per_block(tf_request, B_pad, D_pad, t_rec, vmem_budget):
    """Largest time-chunk (multiple of 8) whose footprint fits the VMEM budget."""
    tf_cap = max(8, _round_up(max(t_rec, 1), 8))
    tf = max(8, min(_round_up(tf_request, 8), tf_cap))

    def footprint(tf_):
        trans = 2 * D_pad * D_pad * 2          # worst case (if Buffered(1) is ignored)
        xblk = 2 * tf_ * B_pad * D_pad * 4     # double-buffered f32 emissions
        tgt = 2 * tf_ * B_pad * 4
        alpha0 = 2 * B_pad * D_pad * 4
        scratch = B_pad * D_pad * 4 + B_pad * 128 * 4
        return trans + xblk + tgt + alpha0 + scratch + (2 << 20)

    while tf > 8 and footprint(tf) > vmem_budget:
        tf -= 8
    return tf, footprint(tf)


# ----------------------------------------------------------------------------
# Fused kernel: denominator chain forward (scaled-prob domain, leaky-HMM) +
# numerator target gather, one HBM pass over x.  Grid axis = time chunks of the
# recursion frames t=1..T-1; (prob, logscale) state persists in VMEM scratch.
# ----------------------------------------------------------------------------
def _chain_fused_kernel(x_ref, tgt_ref, trans_ref, alpha0_ref,
                        den_ref, num_ref, prob_ref, logscale_ref, *,
                        frames_per_block, t_rec_real, t_rec_pad,
                        d_real, b_real, leaky_hmm, inner_unroll):
    c = pl.program_id(0)
    TF, B, D = x_ref.shape
    has_time_pad = t_rec_pad != t_rec_real
    leak_coef = jnp.float32(leaky_hmm / float(d_real))        # leak uses REAL num_pdfs
    # Only real pdf states receive leaked mass (padded lanes stay exactly 0).
    state_mask = (lax.broadcasted_iota(jnp.int32, (1, D), 1) < d_real).astype(jnp.float32)

    @pl.when(c == 0)
    def _():
        # alpha_0 = log_init + x_0 was built in the wrapper; convert to
        # (prob, logscale):  prob = exp(alpha0 - rowmax), logscale = rowmax.
        a0 = alpha0_ref[...]
        m0 = jnp.max(a0, axis=-1, keepdims=True)
        prob_ref[...] = jnp.exp(a0 - m0)
        logscale_ref[...] = m0
        num_ref[...] = jnp.zeros_like(num_ref)
        den_ref[...] = jnp.zeros_like(den_ref)

    # ---- fused numerator: sum_{t,b} x[t,b,target[t,b]] for this chunk ----
    # Padded frames / rows carry target = -1 and therefore contribute exactly 0.
    x_blk = x_ref[...]                                         # (TF, B, D)
    tgt_blk = tgt_ref[...]                                     # (TF, B) int32
    pdf_ids = lax.broadcasted_iota(jnp.int32, (TF, B, D), 2)
    picked = jnp.where(pdf_ids == tgt_blk[:, :, None], x_blk, 0.0)
    flat = picked.reshape(TF * B, D)
    num_ref[...] += jnp.sum(jnp.sum(flat, axis=1, keepdims=True), axis=0, keepdims=True)

    # ---- chain recursion, scaled-probability domain ----
    trans_bf16 = trans_ref[...]                                # resident (D, D) bf16
    t_base = c * frames_per_block

    def frame_step(f, carry):
        prob, logscale = carry                                 # prob in [0,1], (B,D)/(B,1)
        x_t = x_ref[f]                                         # (B, D) emissions (log)
        xm = jnp.max(x_t, axis=-1, keepdims=True)
        ex = jnp.exp(x_t - xm)                                 # the single EUP pass/frame
        tr = jnp.dot(prob.astype(jnp.bfloat16), trans_bf16,
                     preferred_element_type=jnp.float32)       # MXU, f32 accumulate
        pn = tr * ex
        # leaky-HMM mix is linear:  p += (leaky/D) * sum(p)  on real states.
        pm = pn + (leak_coef * jnp.sum(pn, axis=-1, keepdims=True)) * state_mask
        # Renormalize by the row max; the approx-reciprocal error cancels exactly
        # because the same `inv` is folded into the log-scale (-log(inv)).
        m = jnp.maximum(jnp.max(pm, axis=-1, keepdims=True), _TINY)
        inv = pl.reciprocal(m, approx=True)
        prob_new = pm * inv
        logscale_new = logscale + xm - jnp.log(inv)
        if has_time_pad:                                       # only guards padded tail
            keep = (t_base + f) < t_rec_real
            prob_new = jnp.where(keep, prob_new, prob)
            logscale_new = jnp.where(keep, logscale_new, logscale)
        return prob_new, logscale_new

    prob_fin, logscale_fin = lax.fori_loop(
        0, frames_per_block, frame_step,
        (prob_ref[...], logscale_ref[...]), unroll=inner_unroll)
    prob_ref[...] = prob_fin
    logscale_ref[...] = logscale_fin

    @pl.when(c == pl.num_programs(0) - 1)
    def _():
        # per-sequence logsumexp = logscale + log(sum_states prob); sum real rows.
        tot = jnp.sum(prob_fin, axis=-1, keepdims=True)        # (B, 1), >= ~1
        per_seq = logscale_fin + jnp.log(tot)
        bmask = lax.broadcasted_iota(jnp.int32, (B, 1), 0) < b_real
        per_seq = jnp.where(bmask, per_seq, 0.0)
        den_ref[...] = jnp.sum(per_seq, axis=0, keepdims=True)


def chain_and_numerator(x_rec, tgt_rec, trans_bf16, alpha0, *, leaky_hmm,
                        t_rec_real, d_real, b_real, frames_per_block,
                        vmem_limit_bytes):
    """Returns (total denominator log-prob, total numerator gather sum) over the
    recursion frames t=1..T-1 (frame 0 is folded into alpha0 / handled in wrapper)."""
    T_pad, B_pad, D_pad = x_rec.shape
    n_chunks = T_pad // frames_per_block
    inner_unroll = min(8, frames_per_block)

    kernel = functools.partial(
        _chain_fused_kernel,
        frames_per_block=frames_per_block, t_rec_real=t_rec_real, t_rec_pad=T_pad,
        d_real=d_real, b_real=b_real, leaky_hmm=float(leaky_hmm),
        inner_unroll=inner_unroll)

    den, num = pl.pallas_call(
        kernel,
        out_shape=(jax.ShapeDtypeStruct((1, 1), jnp.float32),
                   jax.ShapeDtypeStruct((1, 1), jnp.float32)),
        grid_spec=pltpu.PrefetchScalarGridSpec(
            num_scalar_prefetch=0,
            grid=(n_chunks,),
            in_specs=[
                pl.BlockSpec((frames_per_block, B_pad, D_pad), lambda c: (c, 0, 0)),
                pl.BlockSpec((frames_per_block, B_pad), lambda c: (c, 0)),
                _resident_spec((D_pad, D_pad), lambda c: (0, 0)),   # bf16 transition
                _resident_spec((B_pad, D_pad), lambda c: (0, 0)),   # alpha_0 (log)
            ],
            out_specs=[
                pl.BlockSpec((1, 1), lambda c: (0, 0)),             # denominator
                pl.BlockSpec((1, 1), lambda c: (0, 0)),             # numerator
            ],
            scratch_shapes=[
                pltpu.VMEM((B_pad, D_pad), jnp.float32),            # prob carry
                pltpu.VMEM((B_pad, 1), jnp.float32),                # log-scale carry
            ],
        ),
        compiler_params=pltpu.CompilerParams(
            dimension_semantics=("arbitrary",),
            vmem_limit_bytes=int(vmem_limit_bytes),
        ),
    )(x_rec, tgt_rec, trans_bf16, alpha0)
    return den[0, 0], num[0, 0]


# ----------------------------------------------------------------------------
# SequenceEBMLoss wrapper (forward semantics of the PyTorch module).
# ----------------------------------------------------------------------------
class SequenceEBMLoss:
    def __init__(self, num_pdfs, leaky_hmm=0.1, lfmmi_weight=1.0, ebm_weight=1.0,
                 frames_per_block=32):
        self.num_pdfs = int(num_pdfs)
        self.leaky_hmm = float(leaky_hmm)
        self.lfmmi_weight = float(lfmmi_weight)
        self.ebm_weight = float(ebm_weight)
        self.frames_per_block = int(frames_per_block)

        D = self.num_pdfs
        D_pad = _round_up(max(D, 128), 128)                    # lane-dense pdf axis
        self.D_pad = D_pad
        self.vmem_budget = _device_vmem_budget()

        # Deterministic synthetic denominator graph: dense row-stochastic HMM
        # transition matrix over num_pdfs states + uniform initial distribution.
        # TODO(synk): the real ChainGraph is loaded from an OpenFST file on disk;
        # a sparse FST forward has no self-contained Pallas equivalent here.
        idx = jnp.arange(D, dtype=jnp.float32)
        logits = -0.1 * jnp.abs(idx[:, None] - idx[None, :])
        trans = jax.nn.softmax(logits, axis=-1)
        self.trans_f32 = trans                                  # for reference checks
        trans_pad = jnp.zeros((D_pad, D_pad), jnp.float32).at[:D, :D].set(trans)
        self.trans = trans_pad.astype(jnp.bfloat16)             # resident MXU weights
        self.log_init = jnp.full((1, D), -math.log(float(D)), jnp.float32)

        self.cond_energy = jnp.float32(0.0)                     # device array, no host sync
        self._jit_forward = jax.jit(self._forward_impl, static_argnames=("is_unsup",))

    def _forward_impl(self, x_btd, targets_bt, *, is_unsup):
        B, T, D = x_btd.shape
        assert D == self.num_pdfs
        D_pad = self.D_pad
        B_pad = _round_up(B, 16)                               # bf16 sublane packing
        T_rec = T - 1                                          # recursion frames 1..T-1

        TF, fp = _pick_frames_per_block(self.frames_per_block, B_pad, D_pad,
                                        T_rec, self.vmem_budget)
        vmem_limit = min(self.vmem_budget, max(fp, 32 * 1024 * 1024))
        T_rec_pad = max(TF, _round_up(T_rec, TF))

        x_f32 = x_btd.astype(jnp.float32)
        targets_i32 = targets_bt.astype(jnp.int32)

        # Frame 0 handled in the wrapper (tiny (B, D) slice): initial alpha and
        # the frame-0 numerator term -> no t==0 guard / wasted work in the kernel.
        x0 = x_f32[:, 0, :]                                    # (B, D)
        alpha0 = jnp.full((B_pad, D_pad), _NEG, jnp.float32)
        alpha0 = alpha0.at[:B, :D].set(self.log_init + x0)

        # Single fused pad+transpose pass for the recursion frames (time-major).
        x_rec = jnp.full((T_rec_pad, B_pad, D_pad), _NEG, jnp.float32)
        x_rec = x_rec.at[:T_rec, :B, :D].set(jnp.transpose(x_f32[:, 1:, :], (1, 0, 2)))
        tgt_rec = jnp.full((T_rec_pad, B_pad), -1, jnp.int32)
        tgt_rec = tgt_rec.at[:T_rec, :B].set(jnp.transpose(targets_i32[:, 1:], (1, 0)))

        den_objf, num_rest = chain_and_numerator(
            x_rec, tgt_rec, self.trans, alpha0,
            leaky_hmm=self.leaky_hmm, t_rec_real=T_rec, d_real=D, b_real=B,
            frames_per_block=TF, vmem_limit_bytes=vmem_limit)

        # sample_energy = -ChainFunction(x, ...)
        sample_energy = -den_objf

        # TODO(synk): EBM branch (SGLD Langevin sampling through the acoustic model,
        # replay buffer, file-backed conditional targets, warmup/decay bookkeeping)
        # requires gradient-based sampling and file I/O with no clean Pallas equivalent.

        losses = []
        cond_energy = jnp.float32(0.0)
        if (not is_unsup) and self.lfmmi_weight > 0:
            tgt0 = targets_i32[:, 0]
            x0_pick = jnp.take_along_axis(
                x0, jnp.clip(tgt0, 0, D - 1)[:, None], axis=1)[:, 0]
            num0 = jnp.sum(jnp.where(tgt0 >= 0, x0_pick, 0.0))
            num_objf = -(num0 + num_rest)
            cond_energy = num_objf / (B * T)
            loss_lfmmi = (num_objf - sample_energy) / (B * T)
            losses.append(self.lfmmi_weight * loss_lfmmi)

        loss = sum(losses) if losses else jnp.float32(0.0)
        return loss, cond_energy

    def forward(self, x_btd, targets_bt, is_unsup=False):
        """x_btd: (B, T, D) precomputed model output; targets_bt: (B, T) int.
        `is_unsup` mirrors `targets[0, 0] == -1` in the PyTorch module, passed as a
        static Python flag so the forward path stays jitted with no host syncs."""
        loss, cond_energy = self._jit_forward(x_btd, targets_bt,
                                              is_unsup=bool(is_unsup))
        if (not is_unsup) and self.lfmmi_weight > 0:
            self.cond_energy = cond_energy                     # stays on device
        return loss, None


# ----------------------------------------------------------------------------
# Pure-JAX (log-domain, f32) reference of the same objective, for validation.
# ----------------------------------------------------------------------------
def _reference_loss(x_btd, targets_bt, trans_f32, *, leaky_hmm):
    B, T, D = x_btd.shape
    log_trans = jnp.log(trans_f32)
    log_init = jnp.full((D,), -math.log(float(D)), jnp.float32)
    log_leak = math.log(leaky_hmm / float(D))
    alpha = log_init[None, :] + x_btd[:, 0, :]

    def step(alpha, x_t):
        a = jax.nn.logsumexp(alpha[:, :, None] + log_trans[None, :, :], axis=1) + x_t
        tot = jax.nn.logsumexp(a, axis=-1, keepdims=True)
        return jnp.logaddexp(a, log_leak + tot), None

    alpha, _ = lax.scan(step, alpha, jnp.moveaxis(x_btd[:, 1:, :], 1, 0))
    den = jnp.sum(jax.nn.logsumexp(alpha, axis=-1))
    num = jnp.sum(jnp.take_along_axis(x_btd, targets_bt[:, :, None], axis=2))
    return ((-num) - (-den)) / (B * T)


if __name__ == "__main__":
    B, T, D = 2, 8, 32   # batch, frames, num_pdfs
    key = jax.random.PRNGKey(0)
    kx, kt = jax.random.split(key)
    # `precomputed` model output (the module's `x = model(sample)[0]`), shape (B, T, D)
    x = jax.random.normal(kx, (B, T, D), dtype=jnp.float32)
    targets = jax.random.randint(kt, (B, T), 0, D, dtype=jnp.int32)

    objective = SequenceEBMLoss(num_pdfs=D, leaky_hmm=0.1,
                                lfmmi_weight=1.0, ebm_weight=1.0)
    loss, _ = objective.forward(x, targets, is_unsup=False)
    jax.block_until_ready(loss)
    assert jnp.isfinite(loss), "loss is not finite"

    ref = _reference_loss(x, targets, objective.trans_f32, leaky_hmm=0.1)
    assert jnp.allclose(loss, ref, rtol=5e-2, atol=5e-2), (float(loss), float(ref))
    print("KERNEL_OK")
</pallas_src>

<mosaic_0001>
module attributes {stable_mosaic.version = 11 : i64} {
  func.func @_chain_fused_kernel(%arg0: i32, %arg1: memref<8x16x128xf32, #tpu.memory_space<vmem>>, %arg2: memref<8x16xi32, #tpu.memory_space<vmem>>, %arg3: memref<128x128xbf16, #tpu.memory_space<vmem>>, %arg4: memref<16x128xf32, #tpu.memory_space<vmem>>, %arg5: memref<1x1xf32, #tpu.memory_space<vmem>>, %arg6: memref<1x1xf32, #tpu.memory_space<vmem>>, %arg7: memref<16x128xf32, #tpu.memory_space<vmem>>, %arg8: memref<16x1xf32, #tpu.memory_space<vmem>>) attributes {dimension_semantics = [#tpu.dimension_semantics<arbitrary>], iteration_bounds = array<i64: 1>, scalar_prefetch = 0 : i64, scratch_operands = 2 : i64, tpu.core_type = #tpu.core_type<tc>, window_params = [{transform_indices = @transform_0, window_bounds = array<i64: 8, 16, 128>}, {transform_indices = @transform_1, window_bounds = array<i64: 8, 16>}, {pipeline_mode = #tpu.pipeline_mode<synchronous>, transform_indices = @transform_2, window_bounds = array<i64: 128, 128>}, {pipeline_mode = #tpu.pipeline_mode<synchronous>, transform_indices = @transform_3, window_bounds = array<i64: 16, 128>}, {pipeline_mode = #tpu.pipeline_mode<synchronous>, transform_indices = @transform_4, window_bounds = array<i64: 1, 1>}, {pipeline_mode = #tpu.pipeline_mode<synchronous>, transform_indices = @transform_5, window_bounds = array<i64: 1, 1>}]} {
    %0 = tpu.iota {dimensions = array<i32: 1>} : vector<1x128xi32>
    %c32_i32 = arith.constant 32 : i32
    %1 = vector.broadcast %c32_i32 : i32 to vector<1x128xi32>
    %2 = arith.cmpi slt, %0, %1 : vector<1x128xi32>
    %3 = arith.extui %2 : vector<1x128xi1> to vector<1x128xi32>
    %4 = arith.sitofp %3 : vector<1x128xi32> to vector<1x128xf32>
    %c0_i32 = arith.constant 0 : i32
    %5 = arith.cmpi eq, %arg0, %c0_i32 : i32
    %6 = arith.extui %5 : i1 to i32
    %c0_i32_0 = arith.constant 0 : i32
    %7 = arith.cmpi ne, %6, %c0_i32_0 : i32
    scf.if %7 {
      %c0_90 = arith.constant 0 : index
      %c0_91 = arith.constant 0 : index
      %297 = vector.load %arg4[%c0_90, %c0_91] : memref<16x128xf32, #tpu.memory_space<vmem>>, vector<16x128xf32>
      %cst_92 = arith.constant dense<0xFF800000> : vector<16xf32>
      %298 = vector.multi_reduction <maximumf>, %297, %cst_92 [1] : vector<16x128xf32> to vector<16xf32>
      %299 = vector.shape_cast %298 : vector<16xf32> to vector<16x1xf32>
      %300 = vector.broadcast %299 : vector<16x1xf32> to vector<16x128xf32>
      %301 = arith.subf %297, %300 : vector<16x128xf32>
      %302 = math.exp %301 : vector<16x128xf32>
      %c0_93 = arith.constant 0 : index
      %c0_94 = arith.constant 0 : index
      %303 = vector.load %arg7[%c0_93, %c0_94] : memref<16x128xf32, #tpu.memory_space<vmem>>, vector<16x128xf32>
      tpu.vector_store %arg7[%c0_93, %c0_94], %302 {strides = array<i32>} : memref<16x128xf32, #tpu.memory_space<vmem>>, vector<16x128xf32>,
      %c0_95 = arith.constant 0 : index
      %c0_96 = arith.constant 0 : index
      %304 = vector.load %arg8[%c0_95, %c0_96] : memref<16x1xf32, #tpu.memory_space<vmem>>, vector<16x1xf32>
      tpu.vector_store %arg8[%c0_95, %c0_96], %299 {strides = array<i32>} : memref<16x1xf32, #tpu.memory_space<vmem>>, vector<16x1xf32>,
      %cst_97 = arith.constant 0.000000e+00 : f32
      %305 = vector.broadcast %cst_97 : f32 to vector<1x1xf32>
      %c0_98 = arith.constant 0 : index
      %c0_99 = arith.constant 0 : index
      %306 = vector.load %arg6[%c0_98, %c0_99] : memref<1x1xf32, #tpu.memory_space<vmem>>, vector<1x1xf32>
      tpu.vector_store %arg6[%c0_98, %c0_99], %305 {strides = array<i32>} : memref<1x1xf32, #tpu.memory_space<vmem>>, vector<1x1xf32>,
      %cst_100 = arith.constant 0.000000e+00 : f32
      %307 = vector.broadcast %cst_100 : f32 to vector<1x1xf32>
      %c0_101 = arith.constant 0 : index
      %c0_102 = arith.constant 0 : index
      %308 = vector.load %arg5[%c0_101, %c0_102] : memref<1x1xf32, #tpu.memory_space<vmem>>, vector<1x1xf32>
      tpu.vector_store %arg5[%c0_101, %c0_102], %307 {strides = array<i32>} : memref<1x1xf32, #tpu.memory_space<vmem>>, vector<1x1xf32>,
    } else {
    }
    %c0 = arith.constant 0 : index
    %c0_1 = arith.constant 0 : index
    %c0_2 = arith.constant 0 : index
    %8 = vector.load %arg1[%c0, %c0_1, %c0_2] : memref<8x16x128xf32, #tpu.memory_space<vmem>>, vector<8x16x128xf32>
    %c0_3 = arith.constant 0 : index
    %c0_4 = arith.constant 0 : index
    %9 = vector.load %arg2[%c0_3, %c0_4] : memref<8x16xi32, #tpu.memory_space<vmem>>, vector<8x16xi32>
    %10 = tpu.iota {dimensions = array<i32: 2>} : vector<8x16x128xi32>
    %11 = vector.shape_cast %9 : vector<8x16xi32> to vector<8x16x1xi32>
    %12 = vector.broadcast %11 : vector<8x16x1xi32> to vector<8x16x128xi32>
    %13 = arith.cmpi eq, %10, %12 : vector<8x16x128xi32>
    %cst = arith.constant 0.000000e+00 : f32
    %14 = vector.broadcast %cst : f32 to vector<8x16x128xf32>
    %15 = arith.select %13, %8, %14 : vector<8x16x128xi1>, vector<8x16x128xf32>
    %16 = vector.shape_cast %15 : vector<8x16x128xf32> to vector<128x128xf32>
    %c0_5 = arith.constant 0 : index
    %c0_6 = arith.constant 0 : index
    %17 = vector.load %arg6[%c0_5, %c0_6] : memref<1x1xf32, #tpu.memory_space<vmem>>, vector<1x1xf32>
    %cst_7 = arith.constant dense<0.000000e+00> : vector<128xf32>
    %18 = vector.multi_reduction <add>, %16, %cst_7 [1] : vector<128x128xf32> to vector<128xf32>
    %19 = vector.shape_cast %18 : vector<128xf32> to vector<128x1xf32>
    %cst_8 = arith.constant dense<0.000000e+00> : vector<1xf32>
    %20 = vector.multi_reduction <add>, %19, %cst_8 [0] : vector<128x1xf32> to vector<1xf32>
    %21 = vector.shape_cast %20 : vector<1xf32> to vector<1x1xf32>
    %22 = arith.addf %17, %21 : vector<1x1xf32>
    %c0_9 = arith.constant 0 : index
    %c0_10 = arith.constant 0 : index
    %23 = vector.load %arg6[%c0_9, %c0_10] : memref<1x1xf32, #tpu.memory_space<vmem>>, vector<1x1xf32>
    tpu.vector_store %arg6[%c0_9, %c0_10], %22 {strides = array<i32>} : memref<1x1xf32, #tpu.memory_space<vmem>>, vector<1x1xf32>,
    %c0_11 = arith.constant 0 : index
    %c0_12 = arith.constant 0 : index
    %24 = vector.load %arg3[%c0_11, %c0_12] : memref<128x128xbf16, #tpu.memory_space<vmem>>, vector<128x128xbf16>
    %c8_i32 = arith.constant 8 : i32
    %25 = arith.muli %arg0, %c8_i32 : i32
    %c0_13 = arith.constant 0 : index
    %c0_14 = arith.constant 0 : index
    %26 = vector.load %arg7[%c0_13, %c0_14] : memref<16x128xf32, #tpu.memory_space<vmem>>, vector<16x128xf32>
    %c0_15 = arith.constant 0 : index
    %c0_16 = arith.constant 0 : index
    %27 = vector.load %arg8[%c0_15, %c0_16] : memref<16x1xf32, #tpu.memory_space<vmem>>, vector<16x1xf32>
    %cst_17 = arith.constant 3.125000e-03 : f32
    %c0_i32_18 = arith.constant 0 : i32
    %28 = arith.index_cast %c0_i32_18 : i32 to index
    %c0_19 = arith.constant 0 : index
    %c0_20 = arith.constant 0 : index
    %29 = vector.load %arg1[%28, %c0_19, %c0_20] : memref<8x16x128xf32, #tpu.memory_space<vmem>>, vector<1x16x128xf32>
    %30 = vector.shape_cast %29 : vector<1x16x128xf32> to vector<16x128xf32>
    %cst_21 = arith.constant dense<0xFF800000> : vector<16xf32>
    %31 = vector.multi_reduction <maximumf>, %30, %cst_21 [1] : vector<16x128xf32> to vector<16xf32>
    %32 = vector.shape_cast %31 : vector<16xf32> to vector<16x1xf32>
    %33 = vector.broadcast %32 : vector<16x1xf32> to vector<16x128xf32>
    %34 = arith.subf %30, %33 : vector<16x128xf32>
    %35 = math.exp %34 : vector<16x128xf32>
    %36 = arith.truncf %26 : vector<16x128xf32> to vector<16x128xbf16>
    %cst_22 = arith.constant dense<0.000000e+00> : vector<16x128xf32>
    %37 = tpu.matmul %36, %24, %cst_22 {dimension_numbers = #tpu.dot_dimension_numbers<[1], [0], [0], [1], [0, 0, 1, 1], [], []>} : vector<16x128xbf16>, vector<128x128xbf16>, vector<16x128xf32> -> vector<16x128xf32>
    %38 = arith.mulf %37, %35 : vector<16x128xf32>
    %cst_23 = arith.constant dense<0.000000e+00> : vector<16xf32>
    %39 = vector.multi_reduction <add>, %38, %cst_23 [1] : vector<16x128xf32> to vector<16xf32>
    %40 = vector.shape_cast %39 : vector<16xf32> to vector<16x1xf32>
    %41 = vector.broadcast %cst_17 : f32 to vector<16x1xf32>
    %42 = arith.mulf %41, %40 : vector<16x1xf32>
    %43 = vector.broadcast %42 : vector<16x1xf32> to vector<16x128xf32>
    %44 = vector.broadcast %4 : vector<1x128xf32> to vector<16x128xf32>
    %45 = arith.mulf %43, %44 : vector<16x128xf32>
    %46 = arith.addf %38, %45 : vector<16x128xf32>
    %cst_24 = arith.constant dense<0xFF800000> : vector<16xf32>
    %47 = vector.multi_reduction <maximumf>, %46, %cst_24 [1] : vector<16x128xf32> to vector<16xf32>
    %48 = vector.shape_cast %47 : vector<16xf32> to vector<16x1xf32>
    %cst_25 = arith.constant 1.000000e-30 : f32
    %49 = vector.broadcast %cst_25 : f32 to vector<16x1xf32>
    %50 = arith.maximumf %48, %49 : vector<16x1xf32>
    %51 = tpu.reciprocal %50 {approx = true} : vector<16x1xf32> -> vector<16x1xf32>
    %52 = vector.broadcast %51 : vector<16x1xf32> to vector<16x128xf32>
    %53 = arith.mulf %46, %52 : vector<16x128xf32>
    %54 = arith.addf %27, %32 : vector<16x1xf32>
    %55 = math.log %51 : vector<16x1xf32>
    %56 = arith.subf %54, %55 : vector<16x1xf32>
    %57 = arith.addi %25, %c0_i32_18 : i32
    %c7_i32 = arith.constant 7 : i32
    %58 = arith.cmpi slt, %57, %c7_i32 : i32
    %59 = arith.select %58, %53, %26 : vector<16x128xf32>
    %60 = arith.select %58, %56, %27 : vector<16x1xf32>
    %c1_i32 = arith.constant 1 : i32
    %61 = arith.index_cast %c1_i32 : i32 to index
    %c0_26 = arith.constant 0 : index
    %c0_27 = arith.constant 0 : index
    %62 = vector.load %arg1[%61, %c0_26, %c0_27] : memref<8x16x128xf32, #tpu.memory_space<vmem>>, vector<1x16x128xf32>
    %63 = vector.shape_cast %62 : vector<1x16x128xf32> to vector<16x128xf32>
    %cst_28 = arith.constant dense<0xFF800000> : vector<16xf32>
    %64 = vector.multi_reduction <maximumf>, %63, %cst_28 [1] : vector<16x128xf32> to vector<16xf32>
    %65 = vector.shape_cast %64 : vector<16xf32> to vector<16x1xf32>
    %66 = vector.broadcast %65 : vector<16x1xf32> to vector<16x128xf32>
    %67 = arith.subf %63, %66 : vector<16x128xf32>
    %68 = math.exp %67 : vector<16x128xf32>
    %69 = arith.truncf %59 : vector<16x128xf32> to vector<16x128xbf16>
    %cst_29 = arith.constant dense<0.000000e+00> : vector<16x128xf32>
    %70 = tpu.matmul %69, %24, %cst_29 {dimension_numbers = #tpu.dot_dimension_numbers<[1], [0], [0], [1], [0, 0, 1, 1], [], []>} : vector<16x128xbf16>, vector<128x128xbf16>, vector<16x128xf32> -> vector<16x128xf32>
    %71 = arith.mulf %70, %68 : vector<16x128xf32>
    %cst_30 = arith.constant dense<0.000000e+00> : vector<16xf32>
    %72 = vector.multi_reduction <add>, %71, %cst_30 [1] : vector<16x128xf32> to vector<16xf32>
    %73 = vector.shape_cast %72 : vector<16xf32> to vector<16x1xf32>
    %74 = vector.broadcast %cst_17 : f32 to vector<16x1xf32>
    %75 = arith.mulf %74, %73 : vector<16x1xf32>
    %76 = vector.broadcast %75 : vector<16x1xf32> to vector<16x128xf32>
    %77 = vector.broadcast %4 : vector<1x128xf32> to vector<16x128xf32>
    %78 = arith.mulf %76, %77 : vector<16x128xf32>
    %79 = arith.addf %71, %78 : vector<16x128xf32>
    %cst_31 = arith.constant dense<0xFF800000> : vector<16xf32>
    %80 = vector.multi_reduction <maximumf>, %79, %cst_31 [1] : vector<16x128xf32> to vector<16xf32>
    %81 = vector.shape_cast %80 : vector<16xf32> to vector<16x1xf32>
    %cst_32 = arith.constant 1.000000e-30 : f32
    %82 = vector.broadcast %cst_32 : f32 to vector<16x1xf32>
    %83 = arith.maximumf %81, %82 : vector<16x1xf32>
    %84 = tpu.reciprocal %83 {approx = true} : vector<16x1xf32> -> vector<16x1xf32>
    %85 = vector.broadcast %84 : vector<16x1xf32> to vector<16x128xf32>
    %86 = arith.mulf %79, %85 : vector<16x128xf32>
    %87 = arith.addf %60, %65 : vector<16x1xf32>
    %88 = math.log %84 : vector<16x1xf32>
    %89 = arith.subf %87, %88 : vector<16x1xf32>
    %90 = arith.addi %25, %c1_i32 : i32
    %c7_i32_33 = arith.constant 7 : i32
    %91 = arith.cmpi slt, %90, %c7_i32_33 : i32
    %92 = arith.select %91, %86, %59 : vector<16x128xf32>
    %93 = arith.select %91, %89, %60 : vector<16x1xf32>
    %c2_i32 = arith.constant 2 : i32
    %94 = arith.index_cast %c2_i32 : i32 to index
    %c0_34 = arith.constant 0 : index
    %c0_35 = arith.constant 0 : index
    %95 = vector.load %arg1[%94, %c0_34, %c0_35] : memref<8x16x128xf32, #tpu.memory_space<vmem>>, vector<1x16x128xf32>
    %96 = vector.shape_cast %95 : vector<1x16x128xf32> to vector<16x128xf32>
    %cst_36 = arith.constant dense<0xFF800000> : vector<16xf32>
    %97 = vector.multi_reduction <maximumf>, %96, %cst_36 [1] : vector<16x128xf32> to vector<16xf32>
    %98 = vector.shape_cast %97 : vector<16xf32> to vector<16x1xf32>
    %99 = vector.broadcast %98 : vector<16x1xf32> to vector<16x128xf32>
    %100 = arith.subf %96, %99 : vector<16x128xf32>
    %101 = math.exp %100 : vector<16x128xf32>
    %102 = arith.truncf %92 : vector<16x128xf32> to vector<16x128xbf16>
    %cst_37 = arith.constant dense<0.000000e+00> : vector<16x128xf32>
    %103 = tpu.matmul %102, %24, %cst_37 {dimension_numbers = #tpu.dot_dimension_numbers<[1], [0], [0], [1], [0, 0, 1, 1], [], []>} : vector<16x128xbf16>, vector<128x128xbf16>, vector<16x128xf32> -> vector<16x128xf32>
    %104 = arith.mulf %103, %101 : vector<16x128xf32>
    %cst_38 = arith.constant dense<0.000000e+00> : vector<16xf32>
    %105 = vector.multi_reduction <add>, %104, %cst_38 [1] : vector<16x128xf32> to vector<16xf32>
    %106 = vector.shape_cast %105 : vector<16xf32> to vector<16x1xf32>
    %107 = vector.broadcast %cst_17 : f32 to vector<16x1xf32>
    %108 = arith.mulf %107, %106 : vector<16x1xf32>
    %109 = vector.broadcast %108 : vector<16x1xf32> to vector<16x128xf32>
    %110 = vector.broadcast %4 : vector<1x128xf32> to vector<16x128xf32>
    %111 = arith.mulf %109, %110 : vector<16x128xf32>
    %112 = arith.addf %104, %111 : vector<16x128xf32>
    %cst_39 = arith.constant dense<0xFF800000> : vector<16xf32>
    %113 = vector.multi_reduction <maximumf>, %112, %cst_39 [1] : vector<16x128xf32> to vector<16xf32>
    %114 = vector.shape_cast %113 : vector<16xf32> to vector<16x1xf32>
    %cst_40 = arith.constant 1.000000e-30 : f32
    %115 = vector.broadcast %cst_40 : f32 to vector<16x1xf32>
    %116 = arith.maximumf %114, %115 : vector<16x1xf32>
    %117 = tpu.reciprocal %116 {approx = true} : vector<16x1xf32> -> vector<16x1xf32>
    %118 = vector.broadcast %117 : vector<16x1xf32> to vector<16x128xf32>
    %119 = arith.mulf %112, %118 : vector<16x128xf32>
    %120 = arith.addf %93, %98 : vector<16x1xf32>
    %121 = math.log %117 : vector<16x1xf32>
    %122 = arith.subf %120, %121 : vector<16x1xf32>
    %123 = arith.addi %25, %c2_i32 : i32
    %c7_i32_41 = arith.constant 7 : i32
    %124 = arith.cmpi slt, %123, %c7_i32_41 : i32
    %125 = arith.select %124, %119, %92 : vector<16x128xf32>
    %126 = arith.select %124, %122, %93 : vector<16x1xf32>
    %c3_i32 = arith.constant 3 : i32
    %127 = arith.index_cast %c3_i32 : i32 to index
    %c0_42 = arith.constant 0 : index
    %c0_43 = arith.constant 0 : index
    %128 = vector.load %arg1[%127, %c0_42, %c0_43] : memref<8x16x128xf32, #tpu.memory_space<vmem>>, vector<1x16x128xf32>
    %129 = vector.shape_cast %128 : vector<1x16x128xf32> to vector<16x128xf32>
    %cst_44 = arith.constant dense<0xFF800000> : vector<16xf32>
    %130 = vector.multi_reduction <maximumf>, %129, %cst_44 [1] : vector<16x128xf32> to vector<16xf32>
    %131 = vector.shape_cast %130 : vector<16xf32> to vector<16x1xf32>
    %132 = vector.broadcast %131 : vector<16x1xf32> to vector<16x128xf32>
    %133 = arith.subf %129, %132 : vector<16x128xf32>
    %134 = math.exp %133 : vector<16x128xf32>
    %135 = arith.truncf %125 : vector<16x128xf32> to vector<16x128xbf16>
    %cst_45 = arith.constant dense<0.000000e+00> : vector<16x128xf32>
    %136 = tpu.matmul %135, %24, %cst_45 {dimension_numbers = #tpu.dot_dimension_numbers<[1], [0], [0], [1], [0, 0, 1, 1], [], []>} : vector<16x128xbf16>, vector<128x128xbf16>, vector<16x128xf32> -> vector<16x128xf32>
    %137 = arith.mulf %136, %134 : vector<16x128xf32>
    %cst_46 = arith.constant dense<0.000000e+00> : vector<16xf32>
    %138 = vector.multi_reduction <add>, %137, %cst_46 [1] : vector<16x128xf32> to vector<16xf32>
    %139 = vector.shape_cast %138 : vector<16xf32> to vector<16x1xf32>
    %140 = vector.broadcast %cst_17 : f32 to vector<16x1xf32>
    %141 = arith.mulf %140, %139 : vector<16x1xf32>
    %142 = vector.broadcast %141 : vector<16x1xf32> to vector<16x128xf32>
    %143 = vector.broadcast %4 : vector<1x128xf32> to vector<16x128xf32>
    %144 = arith.mulf %142, %143 : vector<16x128xf32>
    %145 = arith.addf %137, %144 : vector<16x128xf32>
    %cst_47 = arith.constant dense<0xFF800000> : vector<16xf32>
    %146 = vector.multi_reduction <maximumf>, %145, %cst_47 [1] : vector<16x128xf32> to vector<16xf32>
    %147 = vector.shape_cast %146 : vector<16xf32> to vector<16x1xf32>
    %cst_48 = arith.constant 1.000000e-30 : f32
    %148 = vector.broadcast %cst_48 : f32 to vector<16x1xf32>
    %149 = arith.maximumf %147, %148 : vector<16x1xf32>
    %150 = tpu.reciprocal %149 {approx = true} : vector<16x1xf32> -> vector<16x1xf32>
    %151 = vector.broadcast %150 : vector<16x1xf32> to vector<16x128xf32>
    %152 = arith.mulf %145, %151 : vector<16x128xf32>
    %153 = arith.addf %126, %131 : vector<16x1xf32>
    %154 = math.log %150 : vector<16x1xf32>
    %155 = arith.subf %153, %154 : vector<16x1xf32>
    %156 = arith.addi %25, %c3_i32 : i32
    %c7_i32_49 = arith.constant 7 : i32
    %157 = arith.cmpi slt, %156, %c7_i32_49 : i32
    %158 = arith.select %157, %152, %125 : vector<16x128xf32>
    %159 = arith.select %157, %155, %126 : vector<16x1xf32>
    %c4_i32 = arith.constant 4 : i32
    %160 = arith.index_cast %c4_i32 : i32 to index
    %c0_50 = arith.constant 0 : index
    %c0_51 = arith.constant 0 : index
    %161 = vector.load %arg1[%160, %c0_50, %c0_51] : memref<8x16x128xf32, #tpu.memory_space<vmem>>, vector<1x16x128xf32>
    %162 = vector.shape_cast %161 : vector<1x16x128xf32> to vector<16x128xf32>
    %cst_52 = arith.constant dense<0xFF800000> : vector<16xf32>
    %163 = vector.multi_reduction <maximumf>, %162, %cst_52 [1] : vector<16x128xf32> to vector<16xf32>
    %164 = vector.shape_cast %163 : vector<16xf32> to vector<16x1xf32>
    %165 = vector.broadcast %164 : vector<16x1xf32> to vector<16x128xf32>
    %166 = arith.subf %162, %165 : vector<16x128xf32>
    %167 = math.exp %166 : vector<16x128xf32>
    %168 = arith.truncf %158 : vector<16x128xf32> to vector<16x128xbf16>
    %cst_53 = arith.constant dense<0.000000e+00> : vector<16x128xf32>
    %169 = tpu.matmul %168, %24, %cst_53 {dimension_numbers = #tpu.dot_dimension_numbers<[1], [0], [0], [1], [0, 0, 1, 1], [], []>} : vector<16x128xbf16>, vector<128x128xbf16>, vector<16x128xf32> -> vector<16x128xf32>
    %170 = arith.mulf %169, %167 : vector<16x128xf32>
    %cst_54 = arith.constant dense<0.000000e+00> : vector<16xf32>
    %171 = vector.multi_reduction <add>, %170, %cst_54 [1] : vector<16x128xf32> to vector<16xf32>
    %172 = vector.shape_cast %171 : vector<16xf32> to vector<16x1xf32>
    %173 = vector.broadcast %cst_17 : f32 to vector<16x1xf32>
    %174 = arith.mulf %173, %172 : vector<16x1xf32>
    %175 = vector.broadcast %174 : vector<16x1xf32> to vector<16x128xf32>
    %176 = vector.broadcast %4 : vector<1x128xf32> to vector<16x128xf32>
    %177 = arith.mulf %175, %176 : vector<16x128xf32>
    %178 = arith.addf %170, %177 : vector<16x128xf32>
    %cst_55 = arith.constant dense<0xFF800000> : vector<16xf32>
    %179 = vector.multi_reduction <maximumf>, %178, %cst_55 [1] : vector<16x128xf32> to vector<16xf32>
    %180 = vector.shape_cast %179 : vector<16xf32> to vector<16x1xf32>
    %cst_56 = arith.constant 1.000000e-30 : f32
    %181 = vector.broadcast %cst_56 : f32 to vector<16x1xf32>
    %182 = arith.maximumf %180, %181 : vector<16x1xf32>
    %183 = tpu.reciprocal %182 {approx = true} : vector<16x1xf32> -> vector<16x1xf32>
    %184 = vector.broadcast %183 : vector<16x1xf32> to vector<16x128xf32>
    %185 = arith.mulf %178, %184 : vector<16x128xf32>
    %186 = arith.addf %159, %164 : vector<16x1xf32>
    %187 = math.log %183 : vector<16x1xf32>
    %188 = arith.subf %186, %187 : vector<16x1xf32>
    %189 = arith.addi %25, %c4_i32 : i32
    %c7_i32_57 = arith.constant 7 : i32
    %190 = arith.cmpi slt, %189, %c7_i32_57 : i32
    %191 = arith.select %190, %185, %158 : vector<16x128xf32>
    %192 = arith.select %190, %188, %159 : vector<16x1xf32>
    %c5_i32 = arith.constant 5 : i32
    %193 = arith.index_cast %c5_i32 : i32 to index
    %c0_58 = arith.constant 0 : index
    %c0_59 = arith.constant 0 : index
    %194 = vector.load %arg1[%193, %c0_58, %c0_59] : memref<8x16x128xf32, #tpu.memory_space<vmem>>, vector<1x16x128xf32>
    %195 = vector.shape_cast %194 : vector<1x16x128xf32> to vector<16x128xf32>
    %cst_60 = arith.constant dense<0xFF800000> : vector<16xf32>
    %196 = vector.multi_reduction <maximumf>, %195, %cst_60 [1] : vector<16x128xf32> to vector<16xf32>
    %197 = vector.shape_cast %196 : vector<16xf32> to vector<16x1xf32>
    %198 = vector.broadcast %197 : vector<16x1xf32> to vector<16x128xf32>
    %199 = arith.subf %195, %198 : vector<16x128xf32>
    %200 = math.exp %199 : vector<16x128xf32>
    %201 = arith.truncf %191 : vector<16x128xf32> to vector<16x128xbf16>
    %cst_61 = arith.constant dense<0.000000e+00> : vector<16x128xf32>
    %202 = tpu.matmul %201, %24, %cst_61 {dimension_numbers = #tpu.dot_dimension_numbers<[1], [0], [0], [1], [0, 0, 1, 1], [], []>} : vector<16x128xbf16>, vector<128x128xbf16>, vector<16x128xf32> -> vector<16x128xf32>
    %203 = arith.mulf %202, %200 : vector<16x128xf32>
    %cst_62 = arith.constant dense<0.000000e+00> : vector<16xf32>
    %204 = vector.multi_reduction <add>, %203, %cst_62 [1] : vector<16x128xf32> to vector<16xf32>
    %205 = vector.shape_cast %204 : vector<16xf32> to vector<16x1xf32>
    %206 = vector.broadcast %cst_17 : f32 to vector<16x1xf32>
    %207 = arith.mulf %206, %205 : vector<16x1xf32>
    %208 = vector.broadcast %207 : vector<16x1xf32> to vector<16x128xf32>
    %209 = vector.broadcast %4 : vector<1x128xf32> to vector<16x128xf32>
    %210 = arith.mulf %208, %209 : vector<16x128xf32>
    %211 = arith.addf %203, %210 : vector<16x128xf32>
    %cst_63 = arith.constant dense<0xFF800000> : vector<16xf32>
    %212 = vector.multi_reduction <maximumf>, %211, %cst_63 [1] : vector<16x128xf32> to vector<16xf32>
    %213 = vector.shape_cast %212 : vector<16xf32> to vector<16x1xf32>
    %cst_64 = arith.constant 1.000000e-30 : f32
    %214 = vector.broadcast %cst_64 : f32 to vector<16x1xf32>
    %215 = arith.maximumf %213, %214 : vector<16x1xf32>
    %216 = tpu.reciprocal %215 {approx = true} : vector<16x1xf32> -> vector<16x1xf32>
    %217 = vector.broadcast %216 : vector<16x1xf32> to vector<16x128xf32>
    %218 = arith.mulf %211, %217 : vector<16x128xf32>
    %219 = arith.addf %192, %197 : vector<16x1xf32>
    %220 = math.log %216 : vector<16x1xf32>
    %221 = arith.subf %219, %220 : vector<16x1xf32>
    %222 = arith.addi %25, %c5_i32 : i32
    %c7_i32_65 = arith.constant 7 : i32
    %223 = arith.cmpi slt, %222, %c7_i32_65 : i32
    %224 = arith.select %223, %218, %191 : vector<16x128xf32>
    %225 = arith.select %223, %221, %192 : vector<16x1xf32>
    %c6_i32 = arith.constant 6 : i32
    %226 = arith.index_cast %c6_i32 : i32 to index
    %c0_66 = arith.constant 0 : index
    %c0_67 = arith.constant 0 : index
    %227 = vector.load %arg1[%226, %c0_66, %c0_67] : memref<8x16x128xf32, #tpu.memory_space<vmem>>, vector<1x16x128xf32>
    %228 = vector.shape_cast %227 : vector<1x16x128xf32> to vector<16x128xf32>
    %cst_68 = arith.constant dense<0xFF800000> : vector<16xf32>
    %229 = vector.multi_reduction <maximumf>, %228, %cst_68 [1] : vector<16x128xf32> to vector<16xf32>
    %230 = vector.shape_cast %229 : vector<16xf32> to vector<16x1xf32>
    %231 = vector.broadcast %230 : vector<16x1xf32> to vector<16x128xf32>
    %232 = arith.subf %228, %231 : vector<16x128xf32>
    %233 = math.exp %232 : vector<16x128xf32>
    %234 = arith.truncf %224 : vector<16x128xf32> to vector<16x128xbf16>
    %cst_69 = arith.constant dense<0.000000e+00> : vector<16x128xf32>
    %235 = tpu.matmul %234, %24, %cst_69 {dimension_numbers = #tpu.dot_dimension_numbers<[1], [0], [0], [1], [0, 0, 1, 1], [], []>} : vector<16x128xbf16>, vector<128x128xbf16>, vector<16x128xf32> -> vector<16x128xf32>
    %236 = arith.mulf %235, %233 : vector<16x128xf32>
    %cst_70 = arith.constant dense<0.000000e+00> : vector<16xf32>
    %237 = vector.multi_reduction <add>, %236, %cst_70 [1] : vector<16x128xf32> to vector<16xf32>
    %238 = vector.shape_cast %237 : vector<16xf32> to vector<16x1xf32>
    %239 = vector.broadcast %cst_17 : f32 to vector<16x1xf32>
    %240 = arith.mulf %239, %238 : vector<16x1xf32>
    %241 = vector.broadcast %240 : vector<16x1xf32> to vector<16x128xf32>
    %242 = vector.broadcast %4 : vector<1x128xf32> to vector<16x128xf32>
    %243 = arith.mulf %241, %242 : vector<16x128xf32>
    %244 = arith.addf %236, %243 : vector<16x128xf32>
    %cst_71 = arith.constant dense<0xFF800000> : vector<16xf32>
    %245 = vector.multi_reduction <maximumf>, %244, %cst_71 [1] : vector<16x128xf32> to vector<16xf32>
    %246 = vector.shape_cast %245 : vector<16xf32> to vector<16x1xf32>
    %cst_72 = arith.constant 1.000000e-30 : f32
    %247 = vector.broadcast %cst_72 : f32 to vector<16x1xf32>
    %248 = arith.maximumf %246, %247 : vector<16x1xf32>
    %249 = tpu.reciprocal %248 {approx = true} : vector<16x1xf32> -> vector<16x1xf32>
    %250 = vector.broadcast %249 : vector<16x1xf32> to vector<16x128xf32>
    %251 = arith.mulf %244, %250 : vector<16x128xf32>
    %252 = arith.addf %225, %230 : vector<16x1xf32>
    %253 = math.log %249 : vector<16x1xf32>
    %254 = arith.subf %252, %253 : vector<16x1xf32>
    %255 = arith.addi %25, %c6_i32 : i32
    %c7_i32_73 = arith.constant 7 : i32
    %256 = arith.cmpi slt, %255, %c7_i32_73 : i32
    %257 = arith.select %256, %251, %224 : vector<16x128xf32>
    %258 = arith.select %256, %254, %225 : vector<16x1xf32>
    %c7_i32_74 = arith.constant 7 : i32
    %259 = arith.index_cast %c7_i32_74 : i32 to index
    %c0_75 = arith.constant 0 : index
    %c0_76 = arith.constant 0 : index
    %260 = vector.load %arg1[%259, %c0_75, %c0_76] : memref<8x16x128xf32, #tpu.memory_space<vmem>>, vector<1x16x128xf32>
    %261 = vector.shape_cast %260 : vector<1x16x128xf32> to vector<16x128xf32>
    %cst_77 = arith.constant dense<0xFF800000> : vector<16xf32>
    %262 = vector.multi_reduction <maximumf>, %261, %cst_77 [1] : vector<16x128xf32> to vector<16xf32>
    %263 = vector.shape_cast %262 : vector<16xf32> to vector<16x1xf32>
    %264 = vector.broadcast %263 : vector<16x1xf32> to vector<16x128xf32>
    %265 = arith.subf %261, %264 : vector<16x128xf32>
    %266 = math.exp %265 : vector<16x128xf32>
    %267 = arith.truncf %257 : vector<16x128xf32> to vector<16x128xbf16>
    %cst_78 = arith.constant dense<0.000000e+00> : vector<16x128xf32>
    %268 = tpu.matmul %267, %24, %cst_78 {dimension_numbers = #tpu.dot_dimension_numbers<[1], [0], [0], [1], [0, 0, 1, 1], [], []>} : vector<16x128xbf16>, vector<128x128xbf16>, vector<16x128xf32> -> vector<16x128xf32>
    %269 = arith.mulf %268, %266 : vector<16x128xf32>
    %cst_79 = arith.constant dense<0.000000e+00> : vector<16xf32>
    %270 = vector.multi_reduction <add>, %269, %cst_79 [1] : vector<16x128xf32> to vector<16xf32>
    %271 = vector.shape_cast %270 : vector<16xf32> to vector<16x1xf32>
    %272 = vector.broadcast %cst_17 : f32 to vector<16x1xf32>
    %273 = arith.mulf %272, %271 : vector<16x1xf32>
    %274 = vector.broadcast %273 : vector<16x1xf32> to vector<16x128xf32>
    %275 = vector.broadcast %4 : vector<1x128xf32> to vector<16x128xf32>
    %276 = arith.mulf %274, %275 : vector<16x128xf32>
    %277 = arith.addf %269, %276 : vector<16x128xf32>
    %cst_80 = arith.constant dense<0xFF800000> : vector<16xf32>
    %278 = vector.multi_reduction <maximumf>, %277, %cst_80 [1] : vector<16x128xf32> to vector<16xf32>
    %279 = vector.shape_cast %278 : vector<16xf32> to vector<16x1xf32>
    %cst_81 = arith.constant 1.000000e-30 : f32
    %280 = vector.broadcast %cst_81 : f32 to vector<16x1xf32>
    %281 = arith.maximumf %279, %280 : vector<16x1xf32>
    %282 = tpu.reciprocal %281 {approx = true} : vector<16x1xf32> -> vector<16x1xf32>
    %283 = vector.broadcast %282 : vector<16x1xf32> to vector<16x128xf32>
    %284 = arith.mulf %277, %283 : vector<16x128xf32>
    %285 = arith.addf %258, %263 : vector<16x1xf32>
    %286 = math.log %282 : vector<16x1xf32>
    %287 = arith.subf %285, %286 : vector<16x1xf32>
    %288 = arith.addi %25, %c7_i32_74 : i32
    %c7_i32_82 = arith.constant 7 : i32
    %289 = arith.cmpi slt, %288, %c7_i32_82 : i32
    %290 = arith.select %289, %284, %257 : vector<16x128xf32>
    %291 = arith.select %289, %287, %258 : vector<16x1xf32>
    %c8_i32_83 = arith.constant 8 : i32
    %c0_84 = arith.constant 0 : index
    %c0_85 = arith.constant 0 : index
    %292 = vector.load %arg7[%c0_84, %c0_85] : memref<16x128xf32, #tpu.memory_space<vmem>>, vector<16x128xf32>
    tpu.vector_store %arg7[%c0_84, %c0_85], %290 {strides = array<i32>} : memref<16x128xf32, #tpu.memory_space<vmem>>, vector<16x128xf32>,
    %c0_86 = arith.constant 0 : index
    %c0_87 = arith.constant 0 : index
    %293 = vector.load %arg8[%c0_86, %c0_87] : memref<16x1xf32, #tpu.memory_space<vmem>>, vector<16x1xf32>
    tpu.vector_store %arg8[%c0_86, %c0_87], %291 {strides = array<i32>} : memref<16x1xf32, #tpu.memory_space<vmem>>, vector<16x1xf32>,
    %c0_i32_88 = arith.constant 0 : i32
    %294 = arith.cmpi eq, %arg0, %c0_i32_88 : i32
    %295 = arith.extui %294 : i1 to i32
    %c0_i32_89 = arith.constant 0 : i32
    %296 = arith.cmpi ne, %295, %c0_i32_89 : i32
    scf.if %296 {
      %cst_90 = arith.constant dense<0.000000e+00> : vector<16xf32>
      %297 = vector.multi_reduction <add>, %290, %cst_90 [1] : vector<16x128xf32> to vector<16xf32>
      %298 = vector.shape_cast %297 : vector<16xf32> to vector<16x1xf32>
      %299 = math.log %298 : vector<16x1xf32>
      %300 = arith.addf %291, %299 : vector<16x1xf32>
      %301 = tpu.iota {dimensions = array<i32: 0>} : vector<16x1xi32>
      %c2_i32_91 = arith.constant 2 : i32
      %302 = vector.broadcast %c2_i32_91 : i32 to vector<16x1xi32>
      %303 = arith.cmpi slt, %301, %302 : vector<16x1xi32>
      %cst_92 = arith.constant 0.000000e+00 : f32
      %304 = vector.broadcast %cst_92 : f32 to vector<16x1xf32>
      %305 = arith.select %303, %300, %304 : vector<16x1xi1>, vector<16x1xf32>
      %cst_93 = arith.constant dense<0.000000e+00> : vector<1xf32>
      %306 = vector.multi_reduction <add>, %305, %cst_93 [0] : vector<16x1xf32> to vector<1xf32>
      %307 = vector.shape_cast %306 : vector<1xf32> to vector<1x1xf32>
      %c0_94 = arith.constant 0 : index
      %c0_95 = arith.constant 0 : index
      %308 = vector.load %arg5[%c0_94, %c0_95] : memref<1x1xf32, #tpu.memory_space<vmem>>, vector<1x1xf32>
      tpu.vector_store %arg5[%c0_94, %c0_95], %307 {strides = array<i32>} : memref<1x1xf32, #tpu.memory_space<vmem>>, vector<1x1xf32>,
    } else {
    }
    return
  }
  func.func @transform_0(%arg0: i32) -> (i32, i32, i32) {
    %c0_i32 = arith.constant 0 : i32
    %c0_i32_0 = arith.constant 0 : i32
    %c0_i32_1 = arith.constant 0 : i32
    return %arg0, %c0_i32, %c0_i32_0 : i32, i32, i32
  }
  func.func @transform_1(%arg0: i32) -> (i32, i32) {
    %c0_i32 = arith.constant 0 : i32
    %c0_i32_0 = arith.constant 0 : i32
    return %arg0, %c0_i32 : i32, i32
  }
  func.func @transform_2(%arg0: i32) -> (i32, i32) {
    %c0_i32 = arith.constant 0 : i32
    %c0_i32_0 = arith.constant 0 : i32
    %c0_i32_1 = arith.constant 0 : i32
    return %c0_i32, %c0_i32_0 : i32, i32
  }
  func.func @transform_3(%arg0: i32) -> (i32, i32) {
    %c0_i32 = arith.constant 0 : i32
    %c0_i32_0 = arith.constant 0 : i32
    %c0_i32_1 = arith.constant 0 : i32
    return %c0_i32, %c0_i32_0 : i32, i32
  }
  func.func @transform_4(%arg0: i32) -> (i32, i32) {
    %c0_i32 = arith.constant 0 : i32
    %c0_i32_0 = arith.constant 0 : i32
    %c0_i32_1 = arith.constant 0 : i32
    return %c0_i32, %c0_i32_0 : i32, i32
  }
  func.func @transform_5(%arg0: i32) -> (i32, i32) {
    %c0_i32 = arith.constant 0 : i32
    %c0_i32_0 = arith.constant 0 : i32
    %c0_i32_1 = arith.constant 0 : i32
    return %c0_i32, %c0_i32_0 : i32, i32
  }
}

</mosaic_0001>

<llo_original>
// kernel: _forward_impl.1
$region0: #{_forward_impl.1}
  #allocation0 [shape = 'u32[]', space=smem, size = 0x4, offset = 0x4, fixed_abs, tag = 'smem constant byte address 0x4 - core index']
  #allocation1 [shape = 'u32[72,128]{1,0:T(1,128)}', space=vmem, size = 0x9000, scoped, tag = 'internal scratch']
  #allocation2 [shape = 'f32[16,128]{1,0:T(8,128)}', space=vmem, size = 0x2000, scoped, tag = 'scratch operand']
  #allocation3 [shape = 'f32[16,1]{1,0:T(8,128)}', space=vmem, size = 0x2000, scoped, tag = 'scratch operand']
  %s0 = inlined_call_operand.vmem [shape: f32[8,16,128], index: 0, kind: input, shape index: {}]
  %s1 = inlined_call_operand.vmem [shape: s32[8,16], index: 1, kind: input, shape index: {}]
  %s2 = inlined_call_operand.vmem [shape: bf16[128,128], index: 2, kind: input, shape index: {}]
  %s3 = inlined_call_operand.vmem [shape: f32[16,128], index: 3, kind: input, shape index: {}]
  %s4 = inlined_call_operand.hbm [shape: f32[1,1], index: 4, kind: output, shape index: {0}]
  %s5 = inlined_call_operand.hbm [shape: f32[1,1], index: 5, kind: output, shape index: {1}]
  %6 = xla_tuple %s4, %s5
  %s7 = sld [smem:[#allocation0]]
  $region42: #{_forward_impl.1} parent=0
    _
  %s9 = ssub.s32 1, %s7
  %s10 = scalar_select 0, %s9, %s7
  $region1: #{_forward_impl.1} parent=0
    #allocation4 [shape = 'u8[512]{0}', space=vmem, size = 0x400, scoped, tag = 'output window, operand 0, single buffered']
    #allocation5 [shape = 's32[1]{0}', space=sflag, size = 0x4, scoped, tag = 'scoped memory for _forward_impl.1']
    #allocation6 [shape = 'u8[512]{0}', space=vmem, size = 0x400, scoped, tag = 'output window, operand 1, single buffered']
    #allocation7 [shape = 's32[1]{0}', space=sflag, size = 0x4, scoped, tag = 'scoped memory for _forward_impl.1']
    %11 = vsyncpa [#allocation5], 0
    %12 = vsyncpa [#allocation7], 0
    // Predicated region
    $region2: #{_forward_impl.1} parent=1 // pred_check
      _
    $region3: #{_forward_impl.1} parent=1 // pred_check_branch
      %14 = sbr.rel (0) target = $region5
    $region4: #{_forward_impl.1} parent=1 // pred_region
      _
    $region5: #{_forward_impl.1} parent=1 // pred_fallthru
      _
    // Predicated region
    $region6: #{_forward_impl.1} parent=1 // pred_check
      _
    $region7: #{_forward_impl.1} parent=1 // pred_check_branch
      %16 = sbr.rel (0) target = $region9
    $region8: #{_forward_impl.1} parent=1 // pred_region
      _
    $region9: #{_forward_impl.1} parent=1 // pred_fallthru
      _
    // Predicated region
    $region10: #{_forward_impl.1} parent=1 // pred_check
      _
    $region11: #{_forward_impl.1} parent=1 // pred_check_branch
      %18 = sbr.rel (0) target = $region13
    $region12: #{_forward_impl.1} parent=1 // pred_region
      _
    $region13: #{_forward_impl.1} parent=1 // pred_fallthru
      _
    // Predicated region
    $region14: #{_forward_impl.1} parent=1 // pred_check
      _
    $region15: #{_forward_impl.1} parent=1 // pred_check_branch
      %20 = sbr.rel (0) target = $region17
    $region16: #{_forward_impl.1} parent=1 // pred_region
      _
    $region17: #{_forward_impl.1} parent=1 // pred_fallthru
      _
    %v21 = vlaneseq
    %v22 = vand.u32 %v21, 127
    %vm23 = vcmp.lt.s32.totalorder %v22, 32
    %v24 = vsel %vm23, 1, 0
    %v25 = vcvt.s32.f32 %v24
    %p26 = scmp.eq.s32.totalorder 0, 0
    // Predicated region
    $region18: #{_forward_impl.1} parent=1 // pred_check
      %p27 = pneg %p26
    $region19: #{_forward_impl.1} parent=1 // pred_check_branch
      %29 = sbr.rel (%p27) target = $region21
    $region20: #{_forward_impl.1} parent=1 // pred_region
      %v30 = vld [vmem:[%s3] sm:$0xff]
      %v31 = vld [vmem:[%s3 + $0x8] sm:$0xff]
      %32 = vmax.xlane.f32.xlu0 %v30
      %v33 = vpop.xlane.xlu0 %32
      %34 = vmax.xlane.f32.xlu0 %v31
      %v35 = vpop.xlane.xlu0 %34
      %v36 = vsub.f32 %v30, %v33
      %v37 = vsub.f32 %v31, %v35
      %v38 = vmul.f32 %v36, 1.442695
      %v39 = vpow.pop %v38
      %v40 = vmul.f32 %v37, 1.442695
      %v41 = vpow.pop %v40
      %42 = vst [vmem:[#allocation2] sm:$0xff] %v39
      %43 = vst [vmem:[#allocation2 + $0x8] sm:$0xff] %v41
      %vm44 = vcmask 7168
      %45 = vst.msk [vmem:[#allocation3] sm:$0xff] %vm44, %v33
      %46 = vst.msk [vmem:[#allocation3 + $0x8] sm:$0xff] %vm44, %v35
      %vm47 = vcmask 0
      %48 = vst.msk [vmem:[#allocation6] sm:$0x1] %vm47, 0.0
      %49 = vst.msk [vmem:[#allocation4] sm:$0x1] %vm47, 0.0
    $region21: #{_forward_impl.1} parent=1 // pred_fallthru
      _
    %v50 = vld [vmem:[%s0] sm:$0xff]
    %v51 = vld [vmem:[%s0 + $0x8] sm:$0xff]
    %v52 = vld [vmem:[%s0 + $0x10] sm:$0xff]
    %v53 = vld [vmem:[%s0 + $0x18] sm:$0xff]
    %v54 = vld [vmem:[%s0 + $0x20] sm:$0xff]
    %v55 = vld [vmem:[%s0 + $0x28] sm:$0xff]
    %v56 = vld [vmem:[%s0 + $0x30] sm:$0xff]
    %v57 = vld [vmem:[%s0 + $0x38] sm:$0xff]
    %v58 = vld [vmem:[%s0 + $0x40] sm:$0xff]
    %v59 = vld [vmem:[%s0 + $0x48] sm:$0xff]
    %v60 = vld [vmem:[%s0 + $0x50] sm:$0xff]
    %v61 = vld [vmem:[%s0 + $0x58] sm:$0xff]
    %v62 = vld [vmem:[%s0 + $0x60] sm:$0xff]
    %v63 = vld [vmem:[%s0 + $0x68] sm:$0xff]
    %v64 = vld [vmem:[%s0 + $0x70] sm:$0xff]
    %v65 = vld [vmem:[%s0 + $0x78] sm:$0xff]
    %v66 = vld [vmem:[%s1] sm:$0xff]
    %v67 = vperm.slane %v66, 0
    %v68 = vlaneseq
    %v69 = vshrl.u32 %v68, 7
    %71 = vset.pattern.permute.xlu0 %v69
    %72 = vperm.xlu0 %71, %v67
    %v73 = vpop.permute.xlu0 %72
    %v74 = vlaneseq
    %v75 = vshrl.u32 %v74, 7
    %v76 = vadd.s32 %v75, 8
    %77 = vset.pattern.permute.xlu0 %v76
    %78 = vperm.xlu0 %77, %v67
    %v79 = vpop.permute.xlu0 %78
    %v80 = vperm.slane %v66, 1
    %v81 = vlaneseq
    %v82 = vshrl.u32 %v81, 7
    %84 = vset.pattern.permute.xlu0 %v82
    %85 = vperm.xlu0 %84, %v80
    %v86 = vpop.permute.xlu0 %85
    %v87 = vlaneseq
    %v88 = vshrl.u32 %v87, 7
    %v89 = vadd.s32 %v88, 8
    %90 = vset.pattern.permute.xlu0 %v89
    %91 = vperm.xlu0 %90, %v80
    %v92 = vpop.permute.xlu0 %91
    %v93 = vperm.slane %v66, 2
    %v94 = vlaneseq
    %v95 = vshrl.u32 %v94, 7
    %97 = vset.pattern.permute.xlu0 %v95
    %98 = vperm.xlu0 %97, %v93
    %v99 = vpop.permute.xlu0 %98
    %v100 = vlaneseq
    %v101 = vshrl.u32 %v100, 7
    %v102 = vadd.s32 %v101, 8
    %103 = vset.pattern.permute.xlu0 %v102
    %104 = vperm.xlu0 %103, %v93
    %v105 = vpop.permute.xlu0 %104
    %v106 = vperm.slane %v66, 3
    %v107 = vlaneseq
    %v108 = vshrl.u32 %v107, 7
    %110 = vset.pattern.permute.xlu0 %v108
    %111 = vperm.xlu0 %110, %v106
    %v112 = vpop.permute.xlu0 %111
    %v113 = vlaneseq
    %v114 = vshrl.u32 %v113, 7
    %v115 = vadd.s32 %v114, 8
    %116 = vset.pattern.permute.xlu0 %v115
    %117 = vperm.xlu0 %116, %v106
    %v118 = vpop.permute.xlu0 %117
    %v119 = vperm.slane %v66, 4
    %v120 = vlaneseq
    %v121 = vshrl.u32 %v120, 7
    %123 = vset.pattern.permute.xlu0 %v121
    %124 = vperm.xlu0 %123, %v119
    %v125 = vpop.permute.xlu0 %124
    %v126 = vlaneseq
    %v127 = vshrl.u32 %v126, 7
    %v128 = vadd.s32 %v127, 8
    %129 = vset.pattern.permute.xlu0 %v128
    %130 = vperm.xlu0 %129, %v119
    %v131 = vpop.permute.xlu0 %130
    %v132 = vperm.slane %v66, 5
    %v133 = vlaneseq
    %v134 = vshrl.u32 %v133, 7
    %136 = vset.pattern.permute.xlu0 %v134
    %137 = vperm.xlu0 %136, %v132
    %v138 = vpop.permute.xlu0 %137
    %v139 = vlaneseq
    %v140 = vshrl.u32 %v139, 7
    %v141 = vadd.s32 %v140, 8
    %142 = vset.pattern.permute.xlu0 %v141
    %143 = vperm.xlu0 %142, %v132
    %v144 = vpop.permute.xlu0 %143
    %v145 = vperm.slane %v66, 6
    %v146 = vlaneseq
    %v147 = vshrl.u32 %v146, 7
    %149 = vset.pattern.permute.xlu0 %v147
    %150 = vperm.xlu0 %149, %v145
    %v151 = vpop.permute.xlu0 %150
    %v152 = vlaneseq
    %v153 = vshrl.u32 %v152, 7
    %v154 = vadd.s32 %v153, 8
    %155 = vset.pattern.permute.xlu0 %v154
    %156 = vperm.xlu0 %155, %v145
    %v157 = vpop.permute.xlu0 %156
    %v158 = vperm.slane %v66, 7
    %v159 = vlaneseq
    %v160 = vshrl.u32 %v159, 7
    %162 = vset.pattern.permute.xlu0 %v160
    %163 = vperm.xlu0 %162, %v158
    %v164 = vpop.permute.xlu0 %163
    %v165 = vlaneseq
    %v166 = vshrl.u32 %v165, 7
    %v167 = vadd.s32 %v166, 8
    %168 = vset.pattern.permute.xlu0 %v167
    %169 = vperm.xlu0 %168, %v158
    %v170 = vpop.permute.xlu0 %169
    %vm171 = vcmp.eq.s32.totalorder %v22, %v73
    %vm172 = vcmp.eq.s32.totalorder %v22, %v79
    %vm173 = vcmp.eq.s32.totalorder %v22, %v86
    %vm174 = vcmp.eq.s32.totalorder %v22, %v92
    %vm175 = vcmp.eq.s32.totalorder %v22, %v99
    %vm176 = vcmp.eq.s32.totalorder %v22, %v105
    %vm177 = vcmp.eq.s32.totalorder %v22, %v112
    %vm178 = vcmp.eq.s32.totalorder %v22, %v118
    %vm179 = vcmp.eq.s32.totalorder %v22, %v125
    %vm180 = vcmp.eq.s32.totalorder %v22, %v131
    %vm181 = vcmp.eq.s32.totalorder %v22, %v138
    %vm182 = vcmp.eq.s32.totalorder %v22, %v144
    %vm183 = vcmp.eq.s32.totalorder %v22, %v151
    %vm184 = vcmp.eq.s32.totalorder %v22, %v157
    %vm185 = vcmp.eq.s32.totalorder %v22, %v164
    %vm186 = vcmp.eq.s32.totalorder %v22, %v170
    %v187 = vsel %vm171, %v50, 0.0
    %v188 = vsel %vm172, %v51, 0.0
    %v189 = vsel %vm173, %v52, 0.0
    %v190 = vsel %vm174, %v53, 0.0
    %v191 = vsel %vm175, %v54, 0.0
    %v192 = vsel %vm176, %v55, 0.0
    %v193 = vsel %vm177, %v56, 0.0
    %v194 = vsel %vm178, %v57, 0.0
    %v195 = vsel %vm179, %v58, 0.0
    %v196 = vsel %vm180, %v59, 0.0
    %v197 = vsel %vm181, %v60, 0.0
    %v198 = vsel %vm182, %v61, 0.0
    %v199 = vsel %vm183, %v62, 0.0
    %v200 = vsel %vm184, %v63, 0.0
    %v201 = vsel %vm185, %v64, 0.0
    %v202 = vsel %vm186, %v65, 0.0
    %v203 = vld [vmem:[#allocation6] sm:$0x1]
    %204 = vadd.xlane.f32.xlu0 %v187
    %v205 = vpop.xlane.xlu0 %204
    %206 = vadd.xlane.f32.xlu0 %v188
    %v207 = vpop.xlane.xlu0 %206
    %208 = vadd.xlane.f32.xlu0 %v189
    %v209 = vpop.xlane.xlu0 %208
    %210 = vadd.xlane.f32.xlu0 %v190
    %v211 = vpop.xlane.xlu0 %210
    %212 = vadd.xlane.f32.xlu0 %v191
    %v213 = vpop.xlane.xlu0 %212
    %214 = vadd.xlane.f32.xlu0 %v192
    %v215 = vpop.xlane.xlu0 %214
    %216 = vadd.xlane.f32.xlu0 %v193
    %v217 = vpop.xlane.xlu0 %216
    %218 = vadd.xlane.f32.xlu0 %v194
    %v219 = vpop.xlane.xlu0 %218
    %220 = vadd.xlane.f32.xlu0 %v195
    %v221 = vpop.xlane.xlu0 %220
    %222 = vadd.xlane.f32.xlu0 %v196
    %v223 = vpop.xlane.xlu0 %222
    %224 = vadd.xlane.f32.xlu0 %v197
    %v225 = vpop.xlane.xlu0 %224
    %226 = vadd.xlane.f32.xlu0 %v198
    %v227 = vpop.xlane.xlu0 %226
    %228 = vadd.xlane.f32.xlu0 %v199
    %v229 = vpop.xlane.xlu0 %228
    %230 = vadd.xlane.f32.xlu0 %v200
    %v231 = vpop.xlane.xlu0 %230
    %232 = vadd.xlane.f32.xlu0 %v201
    %v233 = vpop.xlane.xlu0 %232
    %234 = vadd.xlane.f32.xlu0 %v202
    %v235 = vpop.xlane.xlu0 %234
    %v236 = vadd.f32 %v205, %v207
    %v237 = vadd.f32 %v236, %v209
    %v238 = vadd.f32 %v237, %v211
    %v239 = vadd.f32 %v238, %v213
    %v240 = vadd.f32 %v239, %v215
    %v241 = vadd.f32 %v240, %v217
    %v242 = vadd.f32 %v241, %v219
    %v243 = vadd.f32 %v242, %v221
    %v244 = vadd.f32 %v243, %v223
    %v245 = vadd.f32 %v244, %v225
    %v246 = vadd.f32 %v245, %v227
    %v247 = vadd.f32 %v246, %v229
    %v248 = vadd.f32 %v247, %v231
    %v249 = vadd.f32 %v248, %v233
    %v250 = vadd.f32 %v249, %v235
    %v251 = vrot.slane %v250, 4
    %v252 = vadd.f32 %v250, %v251
    %v253 = vrot.slane %v252, 2
    %v254 = vadd.f32 %v252, %v253
    %v255 = vrot.slane %v254, 1
    %v256 = vadd.f32 %v254, %v255
    %v257 = vadd.f32 %v203, %v256
    %vm258 = vcmask 0
    %259 = vst.msk [vmem:[#allocation6] sm:$0x1] %vm258, %v257
    %v260 = vld [vmem:[%s2] sm:$0xf]
    %v261 = vld [vmem:[%s2 + $0x4] sm:$0xf]
    %v262 = vld [vmem:[%s2 + $0x8] sm:$0xf]
    %v263 = vld [vmem:[%s2 + $0xc] sm:$0xf]
    %v264 = vld [vmem:[%s2 + $0x10] sm:$0xf]
    %v265 = vld [vmem:[%s2 + $0x14] sm:$0xf]
    %v266 = vld [vmem:[%s2 + $0x18] sm:$0xf]
    %v267 = vld [vmem:[%s2 + $0x1c] sm:$0xf]
    %v268 = vld [vmem:[%s2 + $0x20] sm:$0xf]
    %v269 = vld [vmem:[%s2 + $0x24] sm:$0xf]
    %v270 = vld [vmem:[%s2 + $0x28] sm:$0xf]
    %v271 = vld [vmem:[%s2 + $0x2c] sm:$0xf]
    %v272 = vld [vmem:[%s2 + $0x30] sm:$0xf]
    %v273 = vld [vmem:[%s2 + $0x34] sm:$0xf]
    %v274 = vld [vmem:[%s2 + $0x38] sm:$0xf]
    %v275 = vld [vmem:[%s2 + $0x3c] sm:$0xf]
    %s276 = smul.u32 0, 8
    %v277 = vld [vmem:[#allocation2] sm:$0xff]
    %v278 = vld [vmem:[#allocation2 + $0x8] sm:$0xff]
    %v279 = vld [vmem:[#allocation3] sm:$0xff]
    %v280 = vld [vmem:[#allocation3 + $0x8] sm:$0xff]
    %v281 = vld [vmem:[%s0] sm:$0xff]
    %v282 = vld [vmem:[%s0 + $0x8] sm:$0xff]
    %283 = vmax.xlane.f32.xlu0 %v281
    %v284 = vpop.xlane.xlu0 %283
    %285 = vmax.xlane.f32.xlu0 %v282
    %v286 = vpop.xlane.xlu0 %285
    %v287 = vsub.f32 %v281, %v284
    %v288 = vsub.f32 %v282, %v286
    %v289 = vmul.f32 %v287, 1.442695
    %v290 = vpow.pop %v289
    %v291 = vmul.f32 %v288, 1.442695
    %v292 = vpow.pop %v291
    %v293 = vpack.c.bf16 %v278, %v277
    %v310 = vunpack.c.l.b16 %v260
    %v311 = vunpack.c.l.b16 %v261
    %v312 = vunpack.c.l.b16 %v262
    %v313 = vunpack.c.l.b16 %v263
    %v314 = vunpack.c.l.b16 %v264
    %v315 = vunpack.c.l.b16 %v265
    %v316 = vunpack.c.l.b16 %v266
    %v317 = vunpack.c.l.b16 %v267
    %v318 = vunpack.c.l.b16 %v268
    %v319 = vunpack.c.l.b16 %v269
    %v320 = vunpack.c.l.b16 %v270
    %v321 = vunpack.c.l.b16 %v271
    %v322 = vunpack.c.l.b16 %v272
    %v323 = vunpack.c.l.b16 %v273
    %v324 = vunpack.c.l.b16 %v274
    %v325 = vunpack.c.l.b16 %v275
    %v326 = vpack.c.b16 %v311, %v310
    %v327 = vpack.c.b16 %v313, %v312
    %v328 = vpack.c.b16 %v315, %v314
    %v329 = vpack.c.b16 %v317, %v316
    %v330 = vpack.c.b16 %v319, %v318
    %v331 = vpack.c.b16 %v321, %v320
    %v332 = vpack.c.b16 %v323, %v322
    %v333 = vpack.c.b16 %v325, %v324
    %342 = vmatpush.bf16.msra.mxu0 %v333
    %343 = vmatpush.bf16.msra.mxu0 %v332
    %344 = vmatpush.bf16.msra.mxu0 %v331
    %345 = vmatpush.bf16.msra.mxu0 %v330
    %346 = vmatpush.bf16.msra.mxu0 %v329
    %347 = vmatpush.bf16.msra.mxu0 %v328
    %348 = vmatpush.bf16.msra.mxu0 %v327
    %349 = vmatpush.bf16.msra.mxu0 %v326
    %350 = vmatmul.bf16.gmra.mxu0 %v293
    %v351 = vpop.f32.mrf.mxu0
    %v352 = vadd.f32 0.0, %v351
    %v353 = vpop.f32.mrf.mxu0
    %v354 = vadd.f32 0.0, %v353
    %355 = vdwg.mxu0
    %v356 = vmul.f32 %v352, %v290
    %v357 = vmul.f32 %v354, %v292
    %358 = vadd.xlane.f32.xlu0 %v356
    %v359 = vpop.xlane.xlu0 %358
    %360 = vadd.xlane.f32.xlu0 %v357
    %v361 = vpop.xlane.xlu0 %360
    %v362 = vmul.f32 %v359, 0.003125
    %v363 = vmul.f32 %v361, 0.003125
    %v364 = vmul.f32 %v362, %v25
    %v365 = vmul.f32 %v363, %v25
    %v366 = vadd.f32 %v356, %v364
    %v367 = vadd.f32 %v357, %v365
    %368 = vmax.xlane.f32.xlu0 %v366
    %v369 = vpop.xlane.xlu0 %368
    %370 = vmax.xlane.f32.xlu0 %v367
    %v371 = vpop.xlane.xlu0 %370
    %v372 = vmax.f32 %v369, 1e-30
    %v373 = vmax.f32 %v371, 1e-30
    %v374 = vrcp.pop %v372
    %v375 = vrcp.pop %v373
    %v376 = vmul.f32 %v366, %v374
    %v377 = vmul.f32 %v367, %v375
    %v378 = vadd.f32 %v279, %v284
    %v379 = vadd.f32 %v280, %v286
    %v380 = vlog2.pop %v374
    %v381 = vmul.f32 %v380, 0.6931472
    %v382 = vlog2.pop %v375
    %v383 = vmul.f32 %v382, 0.6931472
    %v384 = vsub.f32 %v378, %v381
    %v385 = vsub.f32 %v379, %v383
    %p386 = scmp.lt.s32.totalorder %s276, 7
    %s387 = scalar_select %p386, 1, 0
    %v388 = vstv %s387
    %vm389 = vcmp.eq.s32.totalorder %v388, 1
    %v390 = vsel %vm389, %v376, %v277
    %v391 = vsel %vm389, %v377, %v278
    %v392 = vsel %vm389, %v384, %v279
    %v393 = vsel %vm389, %v385, %v280
    %s394 = scalar_lea.vmem %s0, 16
    %v395 = vld [vmem:[%s394] sm:$0xff]
    %v396 = vld [vmem:[%s394 + $0x8] sm:$0xff]
    %397 = vmax.xlane.f32.xlu0 %v395
    %v398 = vpop.xlane.xlu0 %397
    %399 = vmax.xlane.f32.xlu0 %v396
    %v400 = vpop.xlane.xlu0 %399
    %v401 = vsub.f32 %v395, %v398
    %v402 = vsub.f32 %v396, %v400
    %v403 = vmul.f32 %v401, 1.442695
    %v404 = vpow.pop %v403
    %v405 = vmul.f32 %v402, 1.442695
    %v406 = vpow.pop %v405
    %v407 = vpack.c.bf16 %v391, %v390
    %408 = vmatpush.bf16.msra.mxu0 %v333
    %409 = vmatpush.bf16.msra.mxu0 %v332
    %410 = vmatpush.bf16.msra.mxu0 %v331
    %411 = vmatpush.bf16.msra.mxu0 %v330
    %412 = vmatpush.bf16.msra.mxu0 %v329
    %413 = vmatpush.bf16.msra.mxu0 %v328
    %414 = vmatpush.bf16.msra.mxu0 %v327
    %415 = vmatpush.bf16.msra.mxu0 %v326
    %416 = vmatmul.bf16.gmra.mxu0 %v407
    %v417 = vpop.f32.mrf.mxu0
    %v418 = vadd.f32 0.0, %v417
    %v419 = vpop.f32.mrf.mxu0
    %v420 = vadd.f32 0.0, %v419
    %421 = vdwg.mxu0
    %v422 = vmul.f32 %v418, %v404
    %v423 = vmul.f32 %v420, %v406
    %424 = vadd.xlane.f32.xlu0 %v422
    %v425 = vpop.xlane.xlu0 %424
    %426 = vadd.xlane.f32.xlu0 %v423
    %v427 = vpop.xlane.xlu0 %426
    %v428 = vmul.f32 %v425, 0.003125
    %v429 = vmul.f32 %v427, 0.003125
    %v430 = vmul.f32 %v428, %v25
    %v431 = vmul.f32 %v429, %v25
    %v432 = vadd.f32 %v422, %v430
    %v433 = vadd.f32 %v423, %v431
    %434 = vmax.xlane.f32.xlu0 %v432
    %v435 = vpop.xlane.xlu0 %434
    %436 = vmax.xlane.f32.xlu0 %v433
    %v437 = vpop.xlane.xlu0 %436
    %v438 = vmax.f32 %v435, 1e-30
    %v439 = vmax.f32 %v437, 1e-30
    %v440 = vrcp.pop %v438
    %v441 = vrcp.pop %v439
    %v442 = vmul.f32 %v432, %v440
    %v443 = vmul.f32 %v433, %v441
    %v444 = vadd.f32 %v392, %v398
    %v445 = vadd.f32 %v393, %v400
    %v446 = vlog2.pop %v440
    %v447 = vmul.f32 %v446, 0.6931472
    %v448 = vlog2.pop %v441
    %v449 = vmul.f32 %v448, 0.6931472
    %v450 = vsub.f32 %v444, %v447
    %v451 = vsub.f32 %v445, %v449
    %s452 = sadd.s32 %s276, 1
    %p453 = scmp.lt.s32.totalorder %s452, 7
    %s454 = scalar_select %p453, 1, 0
    %v455 = vstv %s454
    %vm456 = vcmp.eq.s32.totalorder %v455, 1
    %v457 = vsel %vm456, %v442, %v390
    %v458 = vsel %vm456, %v443, %v391
    %v459 = vsel %vm456, %v450, %v392
    %v460 = vsel %vm456, %v451, %v393
    %s461 = scalar_lea.vmem %s0, 32
    %v462 = vld [vmem:[%s461] sm:$0xff]
    %v463 = vld [vmem:[%s461 + $0x8] sm:$0xff]
    %464 = vmax.xlane.f32.xlu0 %v462
    %v465 = vpop.xlane.xlu0 %464
    %466 = vmax.xlane.f32.xlu0 %v463
    %v467 = vpop.xlane.xlu0 %466
    %v468 = vsub.f32 %v462, %v465
    %v469 = vsub.f32 %v463, %v467
    %v470 = vmul.f32 %v468, 1.442695
    %v471 = vpow.pop %v470
    %v472 = vmul.f32 %v469, 1.442695
    %v473 = vpow.pop %v472
    %v474 = vpack.c.bf16 %v458, %v457
    %475 = vmatpush.bf16.msra.mxu0 %v333
    %476 = vmatpush.bf16.msra.mxu0 %v332
    %477 = vmatpush.bf16.msra.mxu0 %v331
    %478 = vmatpush.bf16.msra.mxu0 %v330
    %479 = vmatpush.bf16.msra.mxu0 %v329
    %480 = vmatpush.bf16.msra.mxu0 %v328
    %481 = vmatpush.bf16.msra.mxu0 %v327
    %482 = vmatpush.bf16.msra.mxu0 %v326
    %483 = vmatmul.bf16.gmra.mxu0 %v474
    %v484 = vpop.f32.mrf.mxu0
    %v485 = vadd.f32 0.0, %v484
    %v486 = vpop.f32.mrf.mxu0
    %v487 = vadd.f32 0.0, %v486
    %488 = vdwg.mxu0
    %v489 = vmul.f32 %v485, %v471
    %v490 = vmul.f32 %v487, %v473
    %491 = vadd.xlane.f32.xlu0 %v489
    %v492 = vpop.xlane.xlu0 %491
    %493 = vadd.xlane.f32.xlu0 %v490
    %v494 = vpop.xlane.xlu0 %493
    %v495 = vmul.f32 %v492, 0.003125
    %v496 = vmul.f32 %v494, 0.003125
    %v497 = vmul.f32 %v495, %v25
    %v498 = vmul.f32 %v496, %v25
    %v499 = vadd.f32 %v489, %v497
    %v500 = vadd.f32 %v490, %v498
    %501 = vmax.xlane.f32.xlu0 %v499
    %v502 = vpop.xlane.xlu0 %501
    %503 = vmax.xlane.f32.xlu0 %v500
    %v504 = vpop.xlane.xlu0 %503
    %v505 = vmax.f32 %v502, 1e-30
    %v506 = vmax.f32 %v504, 1e-30
    %v507 = vrcp.pop %v505
    %v508 = vrcp.pop %v506
    %v509 = vmul.f32 %v499, %v507
    %v510 = vmul.f32 %v500, %v508
    %v511 = vadd.f32 %v459, %v465
    %v512 = vadd.f32 %v460, %v467
    %v513 = vlog2.pop %v507
    %v514 = vmul.f32 %v513, 0.6931472
    %v515 = vlog2.pop %v508
    %v516 = vmul.f32 %v515, 0.6931472
    %v517 = vsub.f32 %v511, %v514
    %v518 = vsub.f32 %v512, %v516
    %s519 = sadd.s32 %s276, 2
    %p520 = scmp.lt.s32.totalorder %s519, 7
    %s521 = scalar_select %p520, 1, 0
    %v522 = vstv %s521
    %vm523 = vcmp.eq.s32.totalorder %v522, 1
    %v524 = vsel %vm523, %v509, %v457
    %v525 = vsel %vm523, %v510, %v458
    %v526 = vsel %vm523, %v517, %v459
    %v527 = vsel %vm523, %v518, %v460
    %s528 = scalar_lea.vmem %s0, 48
    %v529 = vld [vmem:[%s528] sm:$0xff]
    %v530 = vld [vmem:[%s528 + $0x8] sm:$0xff]
    %531 = vmax.xlane.f32.xlu0 %v529
    %v532 = vpop.xlane.xlu0 %531
    %533 = vmax.xlane.f32.xlu0 %v530
    %v534 = vpop.xlane.xlu0 %533
    %v535 = vsub.f32 %v529, %v532
    %v536 = vsub.f32 %v530, %v534
    %v537 = vmul.f32 %v535, 1.442695
    %v538 = vpow.pop %v537
    %v539 = vmul.f32 %v536, 1.442695
    %v540 = vpow.pop %v539
    %v541 = vpack.c.bf16 %v525, %v524
    %542 = vmatpush.bf16.msra.mxu0 %v333
    %543 = vmatpush.bf16.msra.mxu0 %v332
    %544 = vmatpush.bf16.msra.mxu0 %v331
    %545 = vmatpush.bf16.msra.mxu0 %v330
    %546 = vmatpush.bf16.msra.mxu0 %v329
    %547 = vmatpush.bf16.msra.mxu0 %v328
    %548 = vmatpush.bf16.msra.mxu0 %v327
    %549 = vmatpush.bf16.msra.mxu0 %v326
    %550 = vmatmul.bf16.gmra.mxu0 %v541
    %v551 = vpop.f32.mrf.mxu0
    %v552 = vadd.f32 0.0, %v551
    %v553 = vpop.f32.mrf.mxu0
    %v554 = vadd.f32 0.0, %v553
    %555 = vdwg.mxu0
    %v556 = vmul.f32 %v552, %v538
    %v557 = vmul.f32 %v554, %v540
    %558 = vadd.xlane.f32.xlu0 %v556
    %v559 = vpop.xlane.xlu0 %558
    %560 = vadd.xlane.f32.xlu0 %v557
    %v561 = vpop.xlane.xlu0 %560
    %v562 = vmul.f32 %v559, 0.003125
    %v563 = vmul.f32 %v561, 0.003125
    %v564 = vmul.f32 %v562, %v25
    %v565 = vmul.f32 %v563, %v25
    %v566 = vadd.f32 %v556, %v564
    %v567 = vadd.f32 %v557, %v565
    %568 = vmax.xlane.f32.xlu0 %v566
    %v569 = vpop.xlane.xlu0 %568
    %570 = vmax.xlane.f32.xlu0 %v567
    %v571 = vpop.xlane.xlu0 %570
    %v572 = vmax.f32 %v569, 1e-30
    %v573 = vmax.f32 %v571, 1e-30
    %v574 = vrcp.pop %v572
    %v575 = vrcp.pop %v573
    %v576 = vmul.f32 %v566, %v574
    %v577 = vmul.f32 %v567, %v575
    %v578 = vadd.f32 %v526, %v532
    %v579 = vadd.f32 %v527, %v534
    %v580 = vlog2.pop %v574
    %v581 = vmul.f32 %v580, 0.6931472
    %v582 = vlog2.pop %v575
    %v583 = vmul.f32 %v582, 0.6931472
    %v584 = vsub.f32 %v578, %v581
    %v585 = vsub.f32 %v579, %v583
    %s586 = sadd.s32 %s276, 3
    %p587 = scmp.lt.s32.totalorder %s586, 7
    %s588 = scalar_select %p587, 1, 0
    %v589 = vstv %s588
    %vm590 = vcmp.eq.s32.totalorder %v589, 1
    %v591 = vsel %vm590, %v576, %v524
    %v592 = vsel %vm590, %v577, %v525
    %v593 = vsel %vm590, %v584, %v526
    %v594 = vsel %vm590, %v585, %v527
    %s595 = scalar_lea.vmem %s0, 64
    %v596 = vld [vmem:[%s595] sm:$0xff]
    %v597 = vld [vmem:[%s595 + $0x8] sm:$0xff]
    %598 = vmax.xlane.f32.xlu0 %v596
    %v599 = vpop.xlane.xlu0 %598
    %600 = vmax.xlane.f32.xlu0 %v597
    %v601 = vpop.xlane.xlu0 %600
    %v602 = vsub.f32 %v596, %v599
    %v603 = vsub.f32 %v597, %v601
    %v604 = vmul.f32 %v602, 1.442695
    %v605 = vpow.pop %v604
    %v606 = vmul.f32 %v603, 1.442695
    %v607 = vpow.pop %v606
    %v608 = vpack.c.bf16 %v592, %v591
    %609 = vmatpush.bf16.msra.mxu0 %v333
    %610 = vmatpush.bf16.msra.mxu0 %v332
    %611 = vmatpush.bf16.msra.mxu0 %v331
    %612 = vmatpush.bf16.msra.mxu0 %v330
    %613 = vmatpush.bf16.msra.mxu0 %v329
    %614 = vmatpush.bf16.msra.mxu0 %v328
    %615 = vmatpush.bf16.msra.mxu0 %v327
    %616 = vmatpush.bf16.msra.mxu0 %v326
    %617 = vmatmul.bf16.gmra.mxu0 %v608
    %v618 = vpop.f32.mrf.mxu0
    %v619 = vadd.f32 0.0, %v618
    %v620 = vpop.f32.mrf.mxu0
    %v621 = vadd.f32 0.0, %v620
    %622 = vdwg.mxu0
    %v623 = vmul.f32 %v619, %v605
    %v624 = vmul.f32 %v621, %v607
    %625 = vadd.xlane.f32.xlu0 %v623
    %v626 = vpop.xlane.xlu0 %625
    %627 = vadd.xlane.f32.xlu0 %v624
    %v628 = vpop.xlane.xlu0 %627
    %v629 = vmul.f32 %v626, 0.003125
    %v630 = vmul.f32 %v628, 0.003125
    %v631 = vmul.f32 %v629, %v25
    %v632 = vmul.f32 %v630, %v25
    %v633 = vadd.f32 %v623, %v631
    %v634 = vadd.f32 %v624, %v632
    %635 = vmax.xlane.f32.xlu0 %v633
    %v636 = vpop.xlane.xlu0 %635
    %637 = vmax.xlane.f32.xlu0 %v634
    %v638 = vpop.xlane.xlu0 %637
    %v639 = vmax.f32 %v636, 1e-30
    %v640 = vmax.f32 %v638, 1e-30
    %v641 = vrcp.pop %v639
    %v642 = vrcp.pop %v640
    %v643 = vmul.f32 %v633, %v641
    %v644 = vmul.f32 %v634, %v642
    %v645 = vadd.f32 %v593, %v599
    %v646 = vadd.f32 %v594, %v601
    %v647 = vlog2.pop %v641
    %v648 = vmul.f32 %v647, 0.6931472
    %v649 = vlog2.pop %v642
    %v650 = vmul.f32 %v649, 0.6931472
    %v651 = vsub.f32 %v645, %v648
    %v652 = vsub.f32 %v646, %v650
    %s653 = sadd.s32 %s276, 4
    %p654 = scmp.lt.s32.totalorder %s653, 7
    %s655 = scalar_select %p654, 1, 0
    %v656 = vstv %s655
    %vm657 = vcmp.eq.s32.totalorder %v656, 1
    %v658 = vsel %vm657, %v643, %v591
    %v659 = vsel %vm657, %v644, %v592
    %v660 = vsel %vm657, %v651, %v593
    %v661 = vsel %vm657, %v652, %v594
    %s662 = scalar_lea.vmem %s0, 80
    %v663 = vld [vmem:[%s662] sm:$0xff]
    %v664 = vld [vmem:[%s662 + $0x8] sm:$0xff]
    %665 = vmax.xlane.f32.xlu0 %v663
    %v666 = vpop.xlane.xlu0 %665
    %667 = vmax.xlane.f32.xlu0 %v664
    %v668 = vpop.xlane.xlu0 %667
    %v669 = vsub.f32 %v663, %v666
    %v670 = vsub.f32 %v664, %v668
    %v671 = vmul.f32 %v669, 1.442695
    %v672 = vpow.pop %v671
    %v673 = vmul.f32 %v670, 1.442695
    %v674 = vpow.pop %v673
    %v675 = vpack.c.bf16 %v659, %v658
    %676 = vmatpush.bf16.msra.mxu0 %v333
    %677 = vmatpush.bf16.msra.mxu0 %v332
    %678 = vmatpush.bf16.msra.mxu0 %v331
    %679 = vmatpush.bf16.msra.mxu0 %v330
    %680 = vmatpush.bf16.msra.mxu0 %v329
    %681 = vmatpush.bf16.msra.mxu0 %v328
    %682 = vmatpush.bf16.msra.mxu0 %v327
    %683 = vmatpush.bf16.msra.mxu0 %v326
    %684 = vmatmul.bf16.gmra.mxu0 %v675
    %v685 = vpop.f32.mrf.mxu0
    %v686 = vadd.f32 0.0, %v685
    %v687 = vpop.f32.mrf.mxu0
    %v688 = vadd.f32 0.0, %v687
    %689 = vdwg.mxu0
    %v690 = vmul.f32 %v686, %v672
    %v691 = vmul.f32 %v688, %v674
    %692 = vadd.xlane.f32.xlu0 %v690
    %v693 = vpop.xlane.xlu0 %692
    %694 = vadd.xlane.f32.xlu0 %v691
    %v695 = vpop.xlane.xlu0 %694
    %v696 = vmul.f32 %v693, 0.003125
    %v697 = vmul.f32 %v695, 0.003125
    %v698 = vmul.f32 %v696, %v25
    %v699 = vmul.f32 %v697, %v25
    %v700 = vadd.f32 %v690, %v698
    %v701 = vadd.f32 %v691, %v699
    %702 = vmax.xlane.f32.xlu0 %v700
    %v703 = vpop.xlane.xlu0 %702
    %704 = vmax.xlane.f32.xlu0 %v701
    %v705 = vpop.xlane.xlu0 %704
    %v706 = vmax.f32 %v703, 1e-30
    %v707 = vmax.f32 %v705, 1e-30
    %v708 = vrcp.pop %v706
    %v709 = vrcp.pop %v707
    %v710 = vmul.f32 %v700, %v708
    %v711 = vmul.f32 %v701, %v709
    %v712 = vadd.f32 %v660, %v666
    %v713 = vadd.f32 %v661, %v668
    %v714 = vlog2.pop %v708
    %v715 = vmul.f32 %v714, 0.6931472
    %v716 = vlog2.pop %v709
    %v717 = vmul.f32 %v716, 0.6931472
    %v718 = vsub.f32 %v712, %v715
    %v719 = vsub.f32 %v713, %v717
    %s720 = sadd.s32 %s276, 5
    %p721 = scmp.lt.s32.totalorder %s720, 7
    %s722 = scalar_select %p721, 1, 0
    %v723 = vstv %s722
    %vm724 = vcmp.eq.s32.totalorder %v723, 1
    %v725 = vsel %vm724, %v710, %v658
    %v726 = vsel %vm724, %v711, %v659
    %v727 = vsel %vm724, %v718, %v660
    %v728 = vsel %vm724, %v719, %v661
    %s729 = scalar_lea.vmem %s0, 96
    %v730 = vld [vmem:[%s729] sm:$0xff]
    %v731 = vld [vmem:[%s729 + $0x8] sm:$0xff]
    %732 = vmax.xlane.f32.xlu0 %v730
    %v733 = vpop.xlane.xlu0 %732
    %734 = vmax.xlane.f32.xlu0 %v731
    %v735 = vpop.xlane.xlu0 %734
    %v736 = vsub.f32 %v730, %v733
    %v737 = vsub.f32 %v731, %v735
    %v738 = vmul.f32 %v736, 1.442695
    %v739 = vpow.pop %v738
    %v740 = vmul.f32 %v737, 1.442695
    %v741 = vpow.pop %v740
    %v742 = vpack.c.bf16 %v726, %v725
    %743 = vmatpush.bf16.msra.mxu0 %v333
    %744 = vmatpush.bf16.msra.mxu0 %v332
    %745 = vmatpush.bf16.msra.mxu0 %v331
    %746 = vmatpush.bf16.msra.mxu0 %v330
    %747 = vmatpush.bf16.msra.mxu0 %v329
    %748 = vmatpush.bf16.msra.mxu0 %v328
    %749 = vmatpush.bf16.msra.mxu0 %v327
    %750 = vmatpush.bf16.msra.mxu0 %v326
    %751 = vmatmul.bf16.gmra.mxu0 %v742
    %v752 = vpop.f32.mrf.mxu0
    %v753 = vadd.f32 0.0, %v752
    %v754 = vpop.f32.mrf.mxu0
    %v755 = vadd.f32 0.0, %v754
    %756 = vdwg.mxu0
    %v757 = vmul.f32 %v753, %v739
    %v758 = vmul.f32 %v755, %v741
    %759 = vadd.xlane.f32.xlu0 %v757
    %v760 = vpop.xlane.xlu0 %759
    %761 = vadd.xlane.f32.xlu0 %v758
    %v762 = vpop.xlane.xlu0 %761
    %v763 = vmul.f32 %v760, 0.003125
    %v764 = vmul.f32 %v762, 0.003125
    %v765 = vmul.f32 %v763, %v25
    %v766 = vmul.f32 %v764, %v25
    %v767 = vadd.f32 %v757, %v765
    %v768 = vadd.f32 %v758, %v766
    %769 = vmax.xlane.f32.xlu0 %v767
    %v770 = vpop.xlane.xlu0 %769
    %771 = vmax.xlane.f32.xlu0 %v768
    %v772 = vpop.xlane.xlu0 %771
    %v773 = vmax.f32 %v770, 1e-30
    %v774 = vmax.f32 %v772, 1e-30
    %v775 = vrcp.pop %v773
    %v776 = vrcp.pop %v774
    %v777 = vmul.f32 %v767, %v775
    %v778 = vmul.f32 %v768, %v776
    %v779 = vadd.f32 %v727, %v733
    %v780 = vadd.f32 %v728, %v735
    %v781 = vlog2.pop %v775
    %v782 = vmul.f32 %v781, 0.6931472
    %v783 = vlog2.pop %v776
    %v784 = vmul.f32 %v783, 0.6931472
    %v785 = vsub.f32 %v779, %v782
    %v786 = vsub.f32 %v780, %v784
    %s787 = sadd.s32 %s276, 6
    %p788 = scmp.lt.s32.totalorder %s787, 7
    %s789 = scalar_select %p788, 1, 0
    %v790 = vstv %s789
    %vm791 = vcmp.eq.s32.totalorder %v790, 1
    %v792 = vsel %vm791, %v777, %v725
    %v793 = vsel %vm791, %v778, %v726
    %v794 = vsel %vm791, %v785, %v727
    %v795 = vsel %vm791, %v786, %v728
    %s796 = scalar_lea.vmem %s0, 112
    %v797 = vld [vmem:[%s796] sm:$0xff]
    %v798 = vld [vmem:[%s796 + $0x8] sm:$0xff]
    %799 = vmax.xlane.f32.xlu0 %v797
    %v800 = vpop.xlane.xlu0 %799
    %801 = vmax.xlane.f32.xlu0 %v798
    %v802 = vpop.xlane.xlu0 %801
    %v803 = vsub.f32 %v797, %v800
    %v804 = vsub.f32 %v798, %v802
    %v805 = vmul.f32 %v803, 1.442695
    %v806 = vpow.pop %v805
    %v807 = vmul.f32 %v804, 1.442695
    %v808 = vpow.pop %v807
    %v809 = vpack.c.bf16 %v793, %v792
    %810 = vmatpush.bf16.msra.mxu0 %v333
    %811 = vmatpush.bf16.msra.mxu0 %v332
    %812 = vmatpush.bf16.msra.mxu0 %v331
    %813 = vmatpush.bf16.msra.mxu0 %v330
    %814 = vmatpush.bf16.msra.mxu0 %v329
    %815 = vmatpush.bf16.msra.mxu0 %v328
    %816 = vmatpush.bf16.msra.mxu0 %v327
    %817 = vmatpush.bf16.msra.mxu0 %v326
    %818 = vmatmul.bf16.gmra.mxu0 %v809
    %v819 = vpop.f32.mrf.mxu0
    %v820 = vadd.f32 0.0, %v819
    %v821 = vpop.f32.mrf.mxu0
    %v822 = vadd.f32 0.0, %v821
    %823 = vdwg.mxu0
    %v824 = vmul.f32 %v820, %v806
    %v825 = vmul.f32 %v822, %v808
    %826 = vadd.xlane.f32.xlu0 %v824
    %v827 = vpop.xlane.xlu0 %826
    %828 = vadd.xlane.f32.xlu0 %v825
    %v829 = vpop.xlane.xlu0 %828
    %v830 = vmul.f32 %v827, 0.003125
    %v831 = vmul.f32 %v829, 0.003125
    %v832 = vmul.f32 %v830, %v25
    %v833 = vmul.f32 %v831, %v25
    %v834 = vadd.f32 %v824, %v832
    %v835 = vadd.f32 %v825, %v833
    %836 = vmax.xlane.f32.xlu0 %v834
    %v837 = vpop.xlane.xlu0 %836
    %838 = vmax.xlane.f32.xlu0 %v835
    %v839 = vpop.xlane.xlu0 %838
    %v840 = vmax.f32 %v837, 1e-30
    %v841 = vmax.f32 %v839, 1e-30
    %v842 = vrcp.pop %v840
    %v843 = vrcp.pop %v841
    %v844 = vmul.f32 %v834, %v842
    %v845 = vmul.f32 %v835, %v843
    %v846 = vadd.f32 %v794, %v800
    %v847 = vadd.f32 %v795, %v802
    %v848 = vlog2.pop %v842
    %v849 = vmul.f32 %v848, 0.6931472
    %v850 = vlog2.pop %v843
    %v851 = vmul.f32 %v850, 0.6931472
    %v852 = vsub.f32 %v846, %v849
    %v853 = vsub.f32 %v847, %v851
    %s854 = sadd.s32 %s276, 7
    %p855 = scmp.lt.s32.totalorder %s854, 7
    %s856 = scalar_select %p855, 1, 0
    %v857 = vstv %s856
    %vm858 = vcmp.eq.s32.totalorder %v857, 1
    %v859 = vsel %vm858, %v844, %v792
    %v860 = vsel %vm858, %v845, %v793
    %v861 = vsel %vm858, %v852, %v794
    %v862 = vsel %vm858, %v853, %v795
    %863 = vst [vmem:[#allocation2] sm:$0xff] %v859
    %864 = vst [vmem:[#allocation2 + $0x8] sm:$0xff] %v860
    %vm865 = vcmask 7168
    %866 = vst.msk [vmem:[#allocation3] sm:$0xff] %vm865, %v861
    %867 = vst.msk [vmem:[#allocation3 + $0x8] sm:$0xff] %vm865, %v862
    // Predicated region
    $region22: #{_forward_impl.1} parent=1 // pred_check
      %p868 = pneg %p26
    $region23: #{_forward_impl.1} parent=1 // pred_check_branch
      %870 = sbr.rel (%p868) target = $region25
    $region24: #{_forward_impl.1} parent=1 // pred_region
      %871 = vadd.xlane.f32.xlu0 %v859
      %v872 = vpop.xlane.xlu0 %871
      %873 = vadd.xlane.f32.xlu0 %v860
      %v874 = vpop.xlane.xlu0 %873
      %v875 = vlog2.pop %v872
      %v876 = vmul.f32 %v875, 0.6931472
      %v877 = vlog2.pop %v874
      %v878 = vmul.f32 %v877, 0.6931472
      %v879 = vadd.f32 %v861, %v876
      %v880 = vadd.f32 %v862, %v878
      %v881 = vlaneseq
      %v882 = vshrl.u32 %v881, 7
      %v883 = vadd.s32 %v882, 8
      %vm884 = vcmp.lt.s32.totalorder %v882, 2
      %vm885 = vcmp.lt.s32.totalorder %v883, 2
      %v886 = vsel %vm884, %v879, 0.0
      %v887 = vsel %vm885, %v880, 0.0
      %v888 = vsel %vm865, %v886, 0.0
      %v889 = vsel %vm865, %v887, 0.0
      %v890 = vadd.f32 %v888, %v889
      %v891 = vrot.slane %v890, 4
      %v892 = vadd.f32 %v890, %v891
      %v893 = vrot.slane %v892, 2
      %v894 = vadd.f32 %v892, %v893
      %v895 = vrot.slane %v894, 1
      %v896 = vadd.f32 %v894, %v895
      %897 = vst.msk [vmem:[#allocation4] sm:$0x1] %vm258, %v896
    $region25: #{_forward_impl.1} parent=1 // pred_fallthru
      _
    // Predicated region
    $region26: #{_forward_impl.1} parent=1 // pred_check
      _
    $region27: #{_forward_impl.1} parent=1 // pred_check_branch
      %899 = sbr.rel (0) target = $region29
    $region28: #{_forward_impl.1} parent=1 // pred_region
      %901 = vsyncadd [#allocation5], 0
      %s903 = sshll.u32 [#allocation4], 4
      %s904 = int_to_ptr.vmem [resolvable:$true] %s903
      %s905 = sshll.u32 %s4, 4
      %s906 = int_to_ptr.hbm [resolvable:$true] %s905
      %908 = dma.vmem_to_hbm [thread:$0]  %s904, 16, %s906, [#allocation5]
    $region29: #{_forward_impl.1} parent=1 // pred_fallthru
      _
    // Predicated region
    $region30: #{_forward_impl.1} parent=1 // pred_check
      _
    $region31: #{_forward_impl.1} parent=1 // pred_check_branch
      %910 = sbr.rel (0) target = $region33
    $region32: #{_forward_impl.1} parent=1 // pred_region
      %912 = vsyncadd [#allocation7], 0
      %s914 = sshll.u32 [#allocation6], 4
      %s915 = int_to_ptr.vmem [resolvable:$true] %s914
      %s916 = sshll.u32 %s5, 4
      %s917 = int_to_ptr.hbm [resolvable:$true] %s916
      %919 = dma.vmem_to_hbm [thread:$0]  %s915, 16, %s917, [#allocation7]
    $region33: #{_forward_impl.1} parent=1 // pred_fallthru
      _
    // Predicated region
    $region34: #{_forward_impl.1} parent=1 // pred_check
      _
    $region35: #{_forward_impl.1} parent=1 // pred_check_branch
      %921 = sbr.rel (0) target = $region37
    $region36: #{_forward_impl.1} parent=1 // pred_region
      %923 = dma.done [#allocation5], 16
    $region37: #{_forward_impl.1} parent=1 // pred_fallthru
      _
    // Predicated region
    $region38: #{_forward_impl.1} parent=1 // pred_check
      _
    $region39: #{_forward_impl.1} parent=1 // pred_check_branch
      %925 = sbr.rel (0) target = $region41
    $region40: #{_forward_impl.1} parent=1 // pred_region
      %927 = dma.done [#allocation7], 16
    $region41: #{_forward_impl.1} parent=1 // pred_fallthru
      _
    %928 = vsyncpa [#allocation5], 1
    %929 = vsyncpa [#allocation7], 1

</llo_original>
